<compile_context>
chip_gen: v6e
topology: v6e:2x2x1
jax: 0.10.0
libtpu: 0.0.40
codegen_flags: <defaults>
</compile_context>

<pallas_src>
import numpy as np
import jax
import jax.numpy as jnp
from jax.experimental import pallas as pl
from jax.experimental.pallas import tpu as pltpu


def _ceil_to(x, m):
    return ((x + m - 1) // m) * m


def _make_kernel(thresh, r, d_tile, Hout, Wout, filt_vec):
    """Kernel: for one D-tile, compute
         conf : local-maximum map of the thresholded volume
         s0   : (2r+1)^3 box sum of the raw zero-padded volume
         s1   : x-weighted (filt_vec along W) sum of the raw zero-padded volume
    """
    K = 2 * r + 1
    DT = d_tile + 2 * r
    thresh = float(thresh)
    fv = [float(v) for v in filt_vec]

    def kernel(p_hbm, conf_ref, s0_ref, s1_ref, slab, sem):
        i = pl.program_id(0)
        n = pl.num_programs(0)
        slot = i % 2

        # Prime the pipeline: start DMA for the first slab.
        @pl.when(i == 0)
        def _():
            pltpu.make_async_copy(p_hbm.at[pl.ds(0, DT)], slab.at[0], sem.at[0]).start()

        # Prefetch next slab while computing on the current one.
        @pl.when(i + 1 < n)
        def _():
            nxt = 1 - slot
            pltpu.make_async_copy(
                p_hbm.at[pl.ds((i + 1) * d_tile, DT)], slab.at[nxt], sem.at[nxt]
            ).start()

        # Wait for the current slab.
        pltpu.make_async_copy(
            p_hbm.at[pl.ds(i * d_tile, DT)], slab.at[slot], sem.at[slot]
        ).wait()

        S = slab[slot]                               # (DT, Hp, Wp) raw, zero-padded
        zero = jnp.float32(0.0)
        thr = jnp.where(S > thresh, S, zero)         # threshold hoisted out of tap loops

        # ---- separable passes: z -> y -> x ----
        # z pass: leading-dim slices (no lane/sublane relayout)
        sz = S[0:d_tile]
        mz = thr[0:d_tile]
        for dz in range(1, K):
            sz = sz + S[dz:dz + d_tile]
            mz = jnp.maximum(mz, thr[dz:dz + d_tile])

        # y pass: sublane shifts
        szy = sz[:, 0:Hout, :]
        mzy = mz[:, 0:Hout, :]
        for dy in range(1, K):
            szy = szy + sz[:, dy:dy + Hout, :]
            mzy = jnp.maximum(mzy, mz[:, dy:dy + Hout, :])

        # x pass: lane shifts on the smallest arrays; weighted sum feeds s1
        s0 = None
        s1 = None
        mx = None
        for dx in range(K):
            tap = szy[:, :, dx:dx + Wout]
            tapm = mzy[:, :, dx:dx + Wout]
            s0 = tap if s0 is None else s0 + tap
            mx = tapm if mx is None else jnp.maximum(mx, tapm)
            w = fv[dx]
            if w != 0.0:
                wt = tap * w
                s1 = wt if s1 is None else s1 + wt
        if s1 is None:            # degenerate r == 0
            s1 = jnp.zeros_like(s0)

        # Equality test uses the *same* thr array -> bit-identical to the max path.
        thr_center = thr[r:r + d_tile, r:r + Hout, r:r + Wout]
        conf = jnp.where((mx > zero) & (mx == thr_center), mx, zero)

        conf_ref[...] = conf
        s0_ref[...] = s0
        s1_ref[...] = s1

    return kernel


def _compute_dense_maps(vol, thresh, r, filt_vec, d_tile=None,
                        vmem_budget_bytes=16 * 1024 * 1024):
    """Run the Pallas kernel over the full volume; returns cropped numpy (conf, s0, s1)."""
    vol = jnp.asarray(vol, jnp.float32)
    D, H, W = vol.shape

    # Lane/sublane-dense output extents; halo rounded up so the padded array is dense too.
    Hout = _ceil_to(H, 8)
    Wout = _ceil_to(W, 128)
    Hp = Hout + _ceil_to(2 * r, 8)
    Wp = Wout + _ceil_to(2 * r, 128)

    plane_bytes = Hp * Wp * 4
    if d_tile is None:
        # Crude live-set model: ~20 f32 (Hp, Wp) planes per unit of d_tile.
        d_tile = max(1, int(vmem_budget_bytes // (20 * plane_bytes)))
    d_tile = max(1, min(int(d_tile), D))
    n_d = -(-D // d_tile)
    Dcore = n_d * d_tile
    DT = d_tile + 2 * r

    # Zero padding: r halo in front; back-pad covers halo + alignment/tile round-up.
    pad = jnp.pad(vol, ((r, Dcore - D + r), (r, Hp - H - r), (r, Wp - W - r)))

    kernel = _make_kernel(thresh, r, d_tile, Hout, Wout, filt_vec)
    out_block = pl.BlockSpec((d_tile, Hout, Wout), lambda i: (i, 0, 0))
    grid_spec = pltpu.PrefetchScalarGridSpec(
        num_scalar_prefetch=0,
        grid=(n_d,),
        in_specs=[pl.BlockSpec(memory_space=pl.ANY)],     # stays in HBM; manual halo DMA
        out_specs=(out_block, out_block, out_block),
        scratch_shapes=[
            pltpu.VMEM((2, DT, Hp, Wp), jnp.float32),     # double-buffered halo'd slab
            pltpu.SemaphoreType.DMA((2,)),
        ],
    )
    out_shape = tuple(
        jax.ShapeDtypeStruct((Dcore, Hout, Wout), jnp.float32) for _ in range(3)
    )
    conf, s0, s1 = pl.pallas_call(
        kernel,
        out_shape=out_shape,
        grid_spec=grid_spec,
        compiler_params=pltpu.CompilerParams(
            # "arbitrary": the slab prefetch carries state across grid steps.
            # TODO(synk): a parallel-safe variant (per-step DMA) would let v7x split over 2 TCs.
            dimension_semantics=("arbitrary",),
            vmem_limit_bytes=32 * 1024 * 1024,
        ),
    )(pad)
    conf, s0, s1 = jax.block_until_ready((conf, s0, s1))

    conf = np.asarray(conf)[:D, :H, :W]
    s0 = np.asarray(s0)[:D, :H, :W]
    s1 = np.asarray(s1)[:D, :H, :W]
    return conf, s0, s1


class PostprocessPallas:
    """JAX/Pallas re-implementation of utils/postprocess.py::Postprocess.forward."""

    def __init__(self, thresh, radius, setup_params, d_tile=None):
        self.thresh = float(thresh)
        self.r = int(radius)
        self.psize_xy = 1.0 / setup_params['upsampling_factor']
        self.psize_z = setup_params['pixel_size_axial']
        self.zmin = setup_params['zmin']
        self.upsampling_shift = 0
        self.d_tile = d_tile
        # Same (unusual) filter vector as the reference: [-1..-r, 0, r..1]
        self.filt_vec = np.concatenate(
            (-np.arange(1, self.r + 1), np.array((0,)), np.arange(self.r, 0, -1))
        ).astype(np.float32)

    def __call__(self, pred_vol):
        pred_vol = jnp.asarray(pred_vol, jnp.float32)
        # Reference forces 5D with N=C=1; we work on the squeezed (D, H, W) volume.
        vol = pred_vol.reshape(pred_vol.shape[-3:])
        D, H, W = vol.shape

        conf_np, s0, s1 = _compute_dense_maps(
            vol, self.thresh, self.r, self.filt_vec, d_tile=self.d_tile
        )

        # --- host-side glue: data-dependent point extraction (torch.nonzero) ---
        zbool, ybool, xbool = np.nonzero(conf_np)
        if len(zbool) == 0:
            return None, None, None

        denom = s0[zbool, ybool, xbool]
        xloc = s1[zbool, ybool, xbool] / denom
        # Reproduce the reference exactly: it assigns xloc to all three.
        xloc, yloc, zloc = np.squeeze(xloc), np.squeeze(xloc), np.squeeze(xloc)

        xrec = (xbool + xloc - np.floor(W / 2) + self.upsampling_shift + 0.5) * self.psize_xy
        yrec = (ybool + yloc - np.floor(H / 2) + self.upsampling_shift + 0.5) * self.psize_xy
        zrec = (zbool + zloc + 0.5) * self.psize_z + self.zmin

        xyz_rec = np.column_stack((xrec, yrec, zrec))
        xyz_bool = np.column_stack((xbool, ybool, zbool))
        conf_rec = np.squeeze(conf_np[zbool, ybool, xbool])
        return xyz_rec, conf_rec, xyz_bool


def _np_reference_maps(vol, thresh, r, filt_vec):
    """Pure-NumPy (naive 27-tap) reference of the in-kernel compute, for correctness."""
    D, H, W = vol.shape
    K = 2 * r + 1
    thr = np.where(vol > thresh, vol, 0.0).astype(np.float32)
    padthr = np.pad(thr, r, constant_values=-np.inf)
    padraw = np.pad(vol, r).astype(np.float32)
    mx = np.full((D, H, W), -np.inf, dtype=np.float32)
    s0 = np.zeros((D, H, W), dtype=np.float32)
    s1 = np.zeros((D, H, W), dtype=np.float32)
    for dz in range(K):
        for dy in range(K):
            for dx in range(K):
                winthr = padthr[dz:dz + D, dy:dy + H, dx:dx + W]
                winraw = padraw[dz:dz + D, dy:dy + H, dx:dx + W]
                mx = np.maximum(mx, winthr)
                s0 += winraw
                s1 += winraw * filt_vec[dx]
    conf = np.where((mx > 0.0) & (mx == thr), mx, 0.0).astype(np.float32)
    return conf, s0, s1


if __name__ == "__main__":
    setup_params = {
        'device': 'tpu',
        'upsampling_factor': 4,
        'pixel_size_axial': 0.1,
        'zmin': -1.0,
    }
    thresh = 0.8
    radius = 1

    key = jax.random.PRNGKey(0)
    D, H, W = 8, 24, 40
    pred_vol = jax.random.uniform(key, (1, 1, D, H, W), dtype=jnp.float32)

    # d_tile=4 -> 2 grid steps: exercises the halo-DMA double buffering.
    post = PostprocessPallas(thresh, radius, setup_params, d_tile=4)

    # Kernel-level correctness check against an independent NumPy reference.
    vol_np = np.asarray(pred_vol).reshape(D, H, W)
    conf_k, s0_k, s1_k = _compute_dense_maps(
        jnp.asarray(vol_np), thresh, radius, post.filt_vec, d_tile=4)
    conf_r, s0_r, s1_r = _np_reference_maps(vol_np, thresh, radius, post.filt_vec)
    np.testing.assert_allclose(conf_k, conf_r, rtol=1e-6, atol=1e-7)
    np.testing.assert_allclose(s0_k, s0_r, rtol=1e-5, atol=1e-4)
    np.testing.assert_allclose(s1_k, s1_r, rtol=1e-5, atol=1e-4)

    # Full forward pass.
    xyz_rec, conf_rec, xyz_bool = post(pred_vol)
    assert xyz_rec is not None and xyz_rec.shape[-1] == 3 and xyz_bool.shape[-1] == 3

    print("KERNEL_OK")
</pallas_src>

<mosaic_0001>
module attributes {stable_mosaic.version = 11 : i64} {
  func.func @kernel(%arg0: i32, %arg1: memref<10x32x256xf32, #tpu.memory_space<any>>, %arg2: memref<4x24x128xf32, #tpu.memory_space<vmem>>, %arg3: memref<4x24x128xf32, #tpu.memory_space<vmem>>, %arg4: memref<4x24x128xf32, #tpu.memory_space<vmem>>, %arg5: memref<2x6x32x256xf32, #tpu.memory_space<vmem>>, %arg6: memref<2x!tpu.dma_semaphore, #tpu.memory_space<semaphore_mem>>) attributes {dimension_semantics = [#tpu.dimension_semantics<arbitrary>], iteration_bounds = array<i64: 2>, scalar_prefetch = 0 : i64, scratch_operands = 2 : i64, tpu.core_type = #tpu.core_type<tc>, window_params = [{}, {transform_indices = @transform_1, window_bounds = array<i64: 4, 24, 128>}, {transform_indices = @transform_2, window_bounds = array<i64: 4, 24, 128>}, {transform_indices = @transform_3, window_bounds = array<i64: 4, 24, 128>}]} {
    %c2_i32 = arith.constant 2 : i32
    %c0_i32 = arith.constant 0 : i32
    %0 = arith.cmpi eq, %c2_i32, %c0_i32 : i32
    %c1_i32 = arith.constant 1 : i32
    %1 = arith.select %0, %c1_i32, %c2_i32 : i32
    %2 = arith.remsi %arg0, %1 : i32
    %c0_i32_0 = arith.constant 0 : i32
    %3 = arith.cmpi ne, %2, %c0_i32_0 : i32
    %c0_i32_1 = arith.constant 0 : i32
    %4 = arith.cmpi slt, %2, %c0_i32_1 : i32
    %c0_i32_2 = arith.constant 0 : i32
    %5 = arith.cmpi slt, %1, %c0_i32_2 : i32
    %6 = arith.xori %4, %5 : i1
    %7 = arith.andi %6, %3 : i1
    %8 = arith.addi %2, %1 : i32
    %9 = arith.select %7, %8, %2 : i32
    %c0_i32_3 = arith.constant 0 : i32
    %10 = arith.cmpi eq, %arg0, %c0_i32_3 : i32
    %11 = arith.extui %10 : i1 to i32
    %c0_i32_4 = arith.constant 0 : i32
    %12 = arith.cmpi ne, %11, %c0_i32_4 : i32
    scf.if %12 {
      %c0_i32_29 = arith.constant 0 : i32
      %c0_i32_30 = arith.constant 0 : i32
      %c0_i32_31 = arith.constant 0 : i32
      %c0_i32_32 = arith.constant 0 : i32
      %c0_i32_33 = arith.constant 0 : i32
      %75 = tpu.memref_slice %arg1[%c0_i32_31, %c0_i32_32, %c0_i32_33] : memref<10x32x256xf32, #tpu.memory_space<any>> -> memref<6x32x256xf32, #tpu.memory_space<any>>
      %c0_i32_34 = arith.constant 0 : i32
      %c0_i32_35 = arith.constant 0 : i32
      %c0_i32_36 = arith.constant 0 : i32
      %76 = tpu.memref_slice %arg5[%c0_i32_29, %c0_i32_34, %c0_i32_35, %c0_i32_36] : memref<2x6x32x256xf32, #tpu.memory_space<vmem>> -> memref<1x6x32x256xf32, #tpu.memory_space<vmem>>
      %77 = tpu.memref_squeeze %76 : memref<1x6x32x256xf32, #tpu.memory_space<vmem>> -> memref<6x32x256xf32, #tpu.memory_space<vmem>>
      %78 = tpu.memref_slice %arg6[%c0_i32_30] : memref<2x!tpu.dma_semaphore, #tpu.memory_space<semaphore_mem>> -> memref<1x!tpu.dma_semaphore, #tpu.memory_space<semaphore_mem>>
      %79 = tpu.memref_squeeze %78 : memref<1x!tpu.dma_semaphore, #tpu.memory_space<semaphore_mem>> -> memref<!tpu.dma_semaphore, #tpu.memory_space<semaphore_mem>>
      tpu.enqueue_dma source(%75 : memref<6x32x256xf32, #tpu.memory_space<any>>) target(%77 : memref<6x32x256xf32, #tpu.memory_space<vmem>>) target_semaphore(%79 : memref<!tpu.dma_semaphore, #tpu.memory_space<semaphore_mem>>)
    } else {
    }
    %c1_i32_5 = arith.constant 1 : i32
    %13 = arith.addi %arg0, %c1_i32_5 : i32
    %c2_i32_6 = arith.constant 2 : i32
    %14 = arith.cmpi slt, %13, %c2_i32_6 : i32
    %15 = arith.extui %14 : i1 to i32
    %c0_i32_7 = arith.constant 0 : i32
    %16 = arith.cmpi ne, %15, %c0_i32_7 : i32
    scf.if %16 {
      %c1_i32_29 = arith.constant 1 : i32
      %75 = arith.subi %c1_i32_29, %9 : i32
      %c1_i32_30 = arith.constant 1 : i32
      %76 = arith.addi %arg0, %c1_i32_30 : i32
      %c4_i32_31 = arith.constant 4 : i32
      %77 = arith.muli %76, %c4_i32_31 : i32
      %c0_i32_32 = arith.constant 0 : i32
      %c0_i32_33 = arith.constant 0 : i32
      %78 = tpu.memref_slice %arg1[%77, %c0_i32_32, %c0_i32_33] : memref<10x32x256xf32, #tpu.memory_space<any>> -> memref<6x32x256xf32, #tpu.memory_space<any>>
      %c0_i32_34 = arith.constant 0 : i32
      %c0_i32_35 = arith.constant 0 : i32
      %c0_i32_36 = arith.constant 0 : i32
      %79 = tpu.memref_slice %arg5[%75, %c0_i32_34, %c0_i32_35, %c0_i32_36] : memref<2x6x32x256xf32, #tpu.memory_space<vmem>> -> memref<1x6x32x256xf32, #tpu.memory_space<vmem>>
      %80 = tpu.memref_squeeze %79 : memref<1x6x32x256xf32, #tpu.memory_space<vmem>> -> memref<6x32x256xf32, #tpu.memory_space<vmem>>
      %81 = tpu.memref_slice %arg6[%75] : memref<2x!tpu.dma_semaphore, #tpu.memory_space<semaphore_mem>> -> memref<1x!tpu.dma_semaphore, #tpu.memory_space<semaphore_mem>>
      %82 = tpu.memref_squeeze %81 : memref<1x!tpu.dma_semaphore, #tpu.memory_space<semaphore_mem>> -> memref<!tpu.dma_semaphore, #tpu.memory_space<semaphore_mem>>
      tpu.enqueue_dma source(%78 : memref<6x32x256xf32, #tpu.memory_space<any>>) target(%80 : memref<6x32x256xf32, #tpu.memory_space<vmem>>) target_semaphore(%82 : memref<!tpu.dma_semaphore, #tpu.memory_space<semaphore_mem>>)
    } else {
    }
    %c4_i32 = arith.constant 4 : i32
    %17 = arith.muli %arg0, %c4_i32 : i32
    %c0_i32_8 = arith.constant 0 : i32
    %c0_i32_9 = arith.constant 0 : i32
    %18 = tpu.memref_slice %arg1[%17, %c0_i32_8, %c0_i32_9] : memref<10x32x256xf32, #tpu.memory_space<any>> -> memref<6x32x256xf32, #tpu.memory_space<any>>
    %c0_i32_10 = arith.constant 0 : i32
    %c0_i32_11 = arith.constant 0 : i32
    %c0_i32_12 = arith.constant 0 : i32
    %19 = tpu.memref_slice %arg5[%9, %c0_i32_10, %c0_i32_11, %c0_i32_12] : memref<2x6x32x256xf32, #tpu.memory_space<vmem>> -> memref<1x6x32x256xf32, #tpu.memory_space<vmem>>
    %20 = tpu.memref_squeeze %19 : memref<1x6x32x256xf32, #tpu.memory_space<vmem>> -> memref<6x32x256xf32, #tpu.memory_space<vmem>>
    %21 = tpu.memref_slice %arg6[%9] : memref<2x!tpu.dma_semaphore, #tpu.memory_space<semaphore_mem>> -> memref<1x!tpu.dma_semaphore, #tpu.memory_space<semaphore_mem>>
    %22 = tpu.memref_squeeze %21 : memref<1x!tpu.dma_semaphore, #tpu.memory_space<semaphore_mem>> -> memref<!tpu.dma_semaphore, #tpu.memory_space<semaphore_mem>>
    tpu.wait_dma2 semaphore(%22 : memref<!tpu.dma_semaphore, #tpu.memory_space<semaphore_mem>>) src(%18 : memref<6x32x256xf32, #tpu.memory_space<any>>) dst(%20 : memref<6x32x256xf32, #tpu.memory_space<vmem>>)
    %23 = arith.index_cast %9 : i32 to index
    %c0 = arith.constant 0 : index
    %c0_13 = arith.constant 0 : index
    %c0_14 = arith.constant 0 : index
    %24 = vector.load %arg5[%23, %c0, %c0_13, %c0_14] : memref<2x6x32x256xf32, #tpu.memory_space<vmem>>, vector<1x6x32x256xf32>
    %25 = vector.shape_cast %24 : vector<1x6x32x256xf32> to vector<6x32x256xf32>
    %cst = arith.constant 8.000000e-01 : f32
    %26 = vector.broadcast %cst : f32 to vector<6x32x256xf32>
    %27 = arith.cmpf ogt, %25, %26 : vector<6x32x256xf32>
    %cst_15 = arith.constant 0.000000e+00 : f32
    %28 = vector.broadcast %cst_15 : f32 to vector<6x32x256xf32>
    %29 = arith.select %27, %25, %28 : vector<6x32x256xi1>, vector<6x32x256xf32>
    %30 = vector.extract_strided_slice %25 {offsets = [0, 0, 0], sizes = [4, 32, 256], strides = [1, 1, 1]} : vector<6x32x256xf32> to vector<4x32x256xf32>
    %31 = vector.extract_strided_slice %29 {offsets = [0, 0, 0], sizes = [4, 32, 256], strides = [1, 1, 1]} : vector<6x32x256xf32> to vector<4x32x256xf32>
    %32 = vector.extract_strided_slice %25 {offsets = [1, 0, 0], sizes = [4, 32, 256], strides = [1, 1, 1]} : vector<6x32x256xf32> to vector<4x32x256xf32>
    %33 = arith.addf %30, %32 : vector<4x32x256xf32>
    %34 = vector.extract_strided_slice %29 {offsets = [1, 0, 0], sizes = [4, 32, 256], strides = [1, 1, 1]} : vector<6x32x256xf32> to vector<4x32x256xf32>
    %35 = arith.maximumf %31, %34 : vector<4x32x256xf32>
    %36 = vector.extract_strided_slice %25 {offsets = [2, 0, 0], sizes = [4, 32, 256], strides = [1, 1, 1]} : vector<6x32x256xf32> to vector<4x32x256xf32>
    %37 = arith.addf %33, %36 : vector<4x32x256xf32>
    %38 = vector.extract_strided_slice %29 {offsets = [2, 0, 0], sizes = [4, 32, 256], strides = [1, 1, 1]} : vector<6x32x256xf32> to vector<4x32x256xf32>
    %39 = arith.maximumf %35, %38 : vector<4x32x256xf32>
    %40 = vector.extract_strided_slice %37 {offsets = [0, 0, 0], sizes = [4, 24, 256], strides = [1, 1, 1]} : vector<4x32x256xf32> to vector<4x24x256xf32>
    %41 = vector.extract_strided_slice %39 {offsets = [0, 0, 0], sizes = [4, 24, 256], strides = [1, 1, 1]} : vector<4x32x256xf32> to vector<4x24x256xf32>
    %42 = vector.extract_strided_slice %37 {offsets = [0, 1, 0], sizes = [4, 24, 256], strides = [1, 1, 1]} : vector<4x32x256xf32> to vector<4x24x256xf32>
    %43 = arith.addf %40, %42 : vector<4x24x256xf32>
    %44 = vector.extract_strided_slice %39 {offsets = [0, 1, 0], sizes = [4, 24, 256], strides = [1, 1, 1]} : vector<4x32x256xf32> to vector<4x24x256xf32>
    %45 = arith.maximumf %41, %44 : vector<4x24x256xf32>
    %46 = vector.extract_strided_slice %37 {offsets = [0, 2, 0], sizes = [4, 24, 256], strides = [1, 1, 1]} : vector<4x32x256xf32> to vector<4x24x256xf32>
    %47 = arith.addf %43, %46 : vector<4x24x256xf32>
    %48 = vector.extract_strided_slice %39 {offsets = [0, 2, 0], sizes = [4, 24, 256], strides = [1, 1, 1]} : vector<4x32x256xf32> to vector<4x24x256xf32>
    %49 = arith.maximumf %45, %48 : vector<4x24x256xf32>
    %50 = vector.extract_strided_slice %47 {offsets = [0, 0, 0], sizes = [4, 24, 128], strides = [1, 1, 1]} : vector<4x24x256xf32> to vector<4x24x128xf32>
    %51 = vector.extract_strided_slice %49 {offsets = [0, 0, 0], sizes = [4, 24, 128], strides = [1, 1, 1]} : vector<4x24x256xf32> to vector<4x24x128xf32>
    %cst_16 = arith.constant -1.000000e+00 : f32
    %52 = vector.broadcast %cst_16 : f32 to vector<4x24x128xf32>
    %53 = arith.mulf %50, %52 : vector<4x24x128xf32>
    %54 = vector.extract_strided_slice %47 {offsets = [0, 0, 1], sizes = [4, 24, 128], strides = [1, 1, 1]} : vector<4x24x256xf32> to vector<4x24x128xf32>
    %55 = vector.extract_strided_slice %49 {offsets = [0, 0, 1], sizes = [4, 24, 128], strides = [1, 1, 1]} : vector<4x24x256xf32> to vector<4x24x128xf32>
    %56 = arith.addf %50, %54 : vector<4x24x128xf32>
    %57 = arith.maximumf %51, %55 : vector<4x24x128xf32>
    %58 = vector.extract_strided_slice %47 {offsets = [0, 0, 2], sizes = [4, 24, 128], strides = [1, 1, 1]} : vector<4x24x256xf32> to vector<4x24x128xf32>
    %59 = vector.extract_strided_slice %49 {offsets = [0, 0, 2], sizes = [4, 24, 128], strides = [1, 1, 1]} : vector<4x24x256xf32> to vector<4x24x128xf32>
    %60 = arith.addf %56, %58 : vector<4x24x128xf32>
    %61 = arith.maximumf %57, %59 : vector<4x24x128xf32>
    %cst_17 = arith.constant 1.000000e+00 : f32
    %62 = vector.broadcast %cst_17 : f32 to vector<4x24x128xf32>
    %63 = arith.mulf %58, %62 : vector<4x24x128xf32>
    %64 = arith.addf %53, %63 : vector<4x24x128xf32>
    %65 = vector.extract_strided_slice %29 {offsets = [1, 1, 1], sizes = [4, 24, 128], strides = [1, 1, 1]} : vector<6x32x256xf32> to vector<4x24x128xf32>
    %cst_18 = arith.constant 0.000000e+00 : f32
    %66 = vector.broadcast %cst_18 : f32 to vector<4x24x128xf32>
    %67 = arith.cmpf ogt, %61, %66 : vector<4x24x128xf32>
    %68 = arith.cmpf oeq, %61, %65 : vector<4x24x128xf32>
    %69 = arith.andi %67, %68 : vector<4x24x128xi1>
    %cst_19 = arith.constant 0.000000e+00 : f32
    %70 = vector.broadcast %cst_19 : f32 to vector<4x24x128xf32>
    %71 = arith.select %69, %61, %70 : vector<4x24x128xi1>, vector<4x24x128xf32>
    %c0_20 = arith.constant 0 : index
    %c0_21 = arith.constant 0 : index
    %c0_22 = arith.constant 0 : index
    %72 = vector.load %arg2[%c0_20, %c0_21, %c0_22] : memref<4x24x128xf32, #tpu.memory_space<vmem>>, vector<4x24x128xf32>
    tpu.vector_store %arg2[%c0_20, %c0_21, %c0_22], %71 {strides = array<i32>} : memref<4x24x128xf32, #tpu.memory_space<vmem>>, vector<4x24x128xf32>,
    %c0_23 = arith.constant 0 : index
    %c0_24 = arith.constant 0 : index
    %c0_25 = arith.constant 0 : index
    %73 = vector.load %arg3[%c0_23, %c0_24, %c0_25] : memref<4x24x128xf32, #tpu.memory_space<vmem>>, vector<4x24x128xf32>
    tpu.vector_store %arg3[%c0_23, %c0_24, %c0_25], %60 {strides = array<i32>} : memref<4x24x128xf32, #tpu.memory_space<vmem>>, vector<4x24x128xf32>,
    %c0_26 = arith.constant 0 : index
    %c0_27 = arith.constant 0 : index
    %c0_28 = arith.constant 0 : index
    %74 = vector.load %arg4[%c0_26, %c0_27, %c0_28] : memref<4x24x128xf32, #tpu.memory_space<vmem>>, vector<4x24x128xf32>
    tpu.vector_store %arg4[%c0_26, %c0_27, %c0_28], %64 {strides = array<i32>} : memref<4x24x128xf32, #tpu.memory_space<vmem>>, vector<4x24x128xf32>,
    return
  }
  func.func @transform_1(%arg0: i32) -> (i32, i32, i32) {
    %c0_i32 = arith.constant 0 : i32
    %c0_i32_0 = arith.constant 0 : i32
    %c0_i32_1 = arith.constant 0 : i32
    return %arg0, %c0_i32, %c0_i32_0 : i32, i32, i32
  }
  func.func @transform_2(%arg0: i32) -> (i32, i32, i32) {
    %c0_i32 = arith.constant 0 : i32
    %c0_i32_0 = arith.constant 0 : i32
    %c0_i32_1 = arith.constant 0 : i32
    return %arg0, %c0_i32, %c0_i32_0 : i32, i32, i32
  }
  func.func @transform_3(%arg0: i32) -> (i32, i32, i32) {
    %c0_i32 = arith.constant 0 : i32
    %c0_i32_0 = arith.constant 0 : i32
    %c0_i32_1 = arith.constant 0 : i32
    return %arg0, %c0_i32, %c0_i32_0 : i32, i32, i32
  }
}

</mosaic_0001>

<llo_original>
// kernel: tpu_custom_call.1
$region0: #{tpu_custom_call.1}
  #allocation0 [shape = 'u32[]', space=smem, size = 0x4, offset = 0x4, fixed_abs, tag = 'smem constant byte address 0x4 - core index']
  #allocation1 [shape = 'u32[144,128]{1,0:T(1,128)}', space=vmem, size = 0x12000, scoped, tag = 'internal scratch']
  #allocation2 [shape = 'f32[2,6,32,256]{3,2,1,0:T(8,128)}', space=vmem, size = 0x60000, scoped, tag = 'scratch operand']
  #allocation3 [shape = 's32[2]{0}', space=sflag, size = 0x8, scoped, tag = 'scratch operand']
  #allocation9 [shape = 's32[]', space=sflag, size = 0x4, offset = 0, fixed_abs, tag = 'sflag constant byte address 0x0 - dummy sync flag']
  #allocation10 [shape = 's32[]', space=sflag, size = 0x4, offset = 0, fixed_abs, tag = 'sflag constant byte address 0x0 - dummy sync flag']
  #allocation11 [shape = 'u32[]', space=smem, size = 0x4, offset = 0x44, fixed_abs, tag = 'smem constant byte address 0x44 - assertion arg 0']
  #allocation12 [shape = 'u32[]', space=smem, size = 0x4, offset = 0x48, fixed_abs, tag = 'smem constant byte address 0x48 - assertion arg 1']
  #allocation13 [shape = 's32[]', space=sflag, size = 0x4, offset = 0, fixed_abs, tag = 'sflag constant byte address 0x0 - dummy sync flag']
  #allocation14 [shape = 's32[]', space=sflag, size = 0x4, offset = 0, fixed_abs, tag = 'sflag constant byte address 0x0 - dummy sync flag']
  %s0 = inlined_call_operand.hbm [shape: f32[10,32,256], index: 0, kind: input, shape index: {}]
  %s1 = inlined_call_operand.hbm [shape: f32[8,24,128], index: 1, kind: output, shape index: {0}]
  %s2 = inlined_call_operand.hbm [shape: f32[8,24,128], index: 2, kind: output, shape index: {1}]
  %s3 = inlined_call_operand.hbm [shape: f32[8,24,128], index: 3, kind: output, shape index: {2}]
  %4 = xla_tuple %s1, %s2, %s3
  %s5 = sld [smem:[#allocation0]]
  $region57: #{tpu_custom_call.1} parent=0
    _
  %s7 = ssub.s32 1, %s5
  %s8 = scalar_select 0, %s7, %s5
  $region1: #{tpu_custom_call.1} parent=0
    #allocation4 [shape = 'u8[98304]{0}', space=vmem, size = 0x18000, scoped, tag = 'output window, operand 0']
    #allocation5 [shape = 's32[2]{0}', space=sflag, size = 0x8, scoped, tag = 'scoped memory for tpu_custom_call.1']
    #allocation6 [shape = 'u8[98304]{0}', space=vmem, size = 0x18000, scoped, tag = 'output window, operand 1']
    #allocation7 [shape = 's32[2]{0}', space=sflag, size = 0x8, scoped, tag = 'scoped memory for tpu_custom_call.1']
    #allocation8 [shape = 'u8[98304]{0}', space=vmem, size = 0x18000, scoped, tag = 'output window, operand 2']
    %9 = vsyncpa [#allocation5], 0
    %s10 = scalar_lea.sflag [#allocation5], 1
    %11 = vsyncpa %s10, 0
    %12 = vsyncpa [#allocation7], 0
    %s13 = scalar_lea.sflag [#allocation7], 1
    %14 = vsyncpa %s13, 0
    loop: start=0, step=1, limit=3
    $region2: #{tpu_custom_call.1} parent=1 // loop_pre_header
      _
    $region3: #{tpu_custom_call.1} parent=1 // loop_header
      %s16 = sphi 0, %s20
      %p17 = scmp.ge.s32.totalorder %s16, 3
      %s25 = sphi 0, %s27
      %s28 = sphi 0, %s25
      %s38 = sphi 0, %s28
      %s44 = sphi 0, %s46
      %s47 = sphi 0, %s44
      %s57 = sphi 0, %s47
      %s63 = sphi 0, %s65
      %s66 = sphi 0, %s63
      %s76 = sphi 0, %s66
    $region4: #{tpu_custom_call.1} parent=1 // loop_header_branch
      %19 = sbr.rel (%p17) target = $region8
    $region5: #{tpu_custom_call.1} parent=1 // loop_body
      %s21 = ssub.s32 %s16, 1
      %s22 = sadd.s32 %s16, 1
      %s23 = ssub.s32 %s16, %s22
      %p24 = scmp.eq.s32.totalorder %s23, 0
      %s26 = sadd.s32 %s25, 1
      %s27 = scalar_select %p24, %s25, %s26
      %p29 = pneg %p24
      %p30 = scmp.eq.s32.totalorder %s16, 1
      %p31 = por %p29, %p30
      %p32 = scmp.ne.s32.totalorder %s25, %s28
      %p33 = scmp.eq.s32.totalorder %s16, 0
      %p34 = por %p32, %p33
      %p35 = scmp.ne.s32.totalorder %s25, %s28
      %p36 = scmp.eq.s32.totalorder %s21, 1
      %p37 = por %p35, %p36
      %p39 = scmp.ne.s32.totalorder %s28, %s38
      %p40 = scmp.eq.s32.totalorder %s21, 0
      %p41 = por %p39, %p40
      %s42 = ssub.s32 %s16, %s22
      %p43 = scmp.eq.s32.totalorder %s42, 0
      %s45 = sadd.s32 %s44, 1
      %s46 = scalar_select %p43, %s44, %s45
      %p48 = pneg %p43
      %p49 = scmp.eq.s32.totalorder %s16, 1
      %p50 = por %p48, %p49
      %p51 = scmp.ne.s32.totalorder %s44, %s47
      %p52 = scmp.eq.s32.totalorder %s16, 0
      %p53 = por %p51, %p52
      %p54 = scmp.ne.s32.totalorder %s44, %s47
      %p55 = scmp.eq.s32.totalorder %s21, 1
      %p56 = por %p54, %p55
      %p58 = scmp.ne.s32.totalorder %s47, %s57
      %p59 = scmp.eq.s32.totalorder %s21, 0
      %p60 = por %p58, %p59
      %s61 = ssub.s32 %s16, %s22
      %p62 = scmp.eq.s32.totalorder %s61, 0
      %s64 = sadd.s32 %s63, 1
      %s65 = scalar_select %p62, %s63, %s64
      %p67 = pneg %p62
      %p68 = scmp.eq.s32.totalorder %s16, 1
      %p69 = por %p67, %p68
      %p70 = scmp.ne.s32.totalorder %s63, %s66
      %p71 = scmp.eq.s32.totalorder %s16, 0
      %p72 = por %p70, %p71
      %p73 = scmp.ne.s32.totalorder %s63, %s66
      %p74 = scmp.eq.s32.totalorder %s21, 1
      %p75 = por %p73, %p74
      %p77 = scmp.ne.s32.totalorder %s66, %s76
      %p78 = scmp.eq.s32.totalorder %s21, 0
      %p79 = por %p77, %p78
      %p80 = scmp.lt.s32.totalorder %s16, 2
      // Predicated region
      $region9: #{tpu_custom_call.1} parent=5 // pred_check
        %p81 = pneg %p80
      $region10: #{tpu_custom_call.1} parent=5 // pred_check_branch
        %83 = sbr.rel (%p81) target = $region12
      $region11: #{tpu_custom_call.1} parent=5 // pred_region
        %p84 = pneg %p34
        %p85 = pneg %p31
        %s86 = sand.u32 %s25, 1
        %s87 = scalar_lea.sflag [#allocation5], %s86
        %s88 = sand.u32 %s25, 1
        %s89 = smul.addr %s88, 96
        %s90 = scalar_lea.vmem [#allocation4], %s89
        %p91 = pneg %p53
        %p92 = pneg %p50
        %s93 = sand.u32 %s16, 1
        %s94 = scalar_lea.sflag [#allocation7], %s93
        %s95 = sand.u32 %s44, 1
        %s96 = smul.addr %s95, 96
        %s97 = scalar_lea.vmem [#allocation6], %s96
        %p98 = pneg %p72
        %p99 = pneg %p69
        %s100 = sand.u32 %s16, 1
        %s101 = scalar_lea.sflag [#allocation7], %s100
        %s102 = sand.u32 %s63, 1
        %s103 = smul.addr %s102, 96
        %s104 = scalar_lea.vmem [#allocation8], %s103
        %s105 = smul.u32 4, %s16
        %s106 = smul.u32 4, %s16
        %s107 = smul.u32 4, %s16
        %p108 = scmp.lt.s32.totalorder %s16, 0
        %s109 = ssub.s32 0, %s16
        %s110 = scalar_select %p108, %s109, %s16
        %s111 = sand.u32 %s110, 1
        %s112 = ssub.s32 0, %s111
        %s113 = scalar_select %p108, %s112, %s111
        %p114 = scmp.ne.s32.totalorder %s113, 0
        %p115 = scmp.lt.s32.totalorder %s113, 0
        %p116 = pnand %p115, %p114
        %p117 = pneg %p116
        %s118 = sadd.s32 %s113, 2
        %s119 = scalar_select %p117, %s118, %s113
        %p120 = scmp.eq.s32.totalorder %s16, 0
        // Predicated region
        $region13: #{tpu_custom_call.1} parent=11 // pred_check
          %p121 = pneg %p120
        $region14: #{tpu_custom_call.1} parent=11 // pred_check_branch
          %123 = sbr.rel (%p121) target = $region16
        $region15: #{tpu_custom_call.1} parent=11 // pred_region
          // Predicated region
          $region17: #{tpu_custom_call.1} parent=15 // pred_check
            _
          $region18: #{tpu_custom_call.1} parent=15 // pred_check_branch
            %125 = sbr.rel target = $region20
          $region19: #{tpu_custom_call.1} parent=15 // pred_region
            %126 = sst [smem:[#allocation11]] [#allocation10]
            %127 = sst [smem:[#allocation12]] [#allocation9]
          $region20: #{tpu_custom_call.1} parent=15 // pred_fallthru
            _
          %129 = shalt.err (0)
          %s131 = sshll.u32 [#allocation2], 4
          %s132 = int_to_ptr.vmem [resolvable:$true] %s131
          %134 = dma.hbm_to_vmem [thread:$0]  %s0, 6144, %s132, [#allocation3]
        $region16: #{tpu_custom_call.1} parent=11 // pred_fallthru
          _
        %s135 = sadd.s32 %s16, 1
        %p136 = scmp.lt.s32.totalorder %s135, 2
        // Predicated region
        $region21: #{tpu_custom_call.1} parent=11 // pred_check
          %p137 = pneg %p136
        $region22: #{tpu_custom_call.1} parent=11 // pred_check_branch
          %139 = sbr.rel (%p137) target = $region24
        $region23: #{tpu_custom_call.1} parent=11 // pred_region
          %s140 = ssub.s32 1, %s119
          %s141 = smul.u32 %s135, 4
          %s142 = smul.u32 %s141, 8
          %s143 = smul.addr %s142, 128
          %s144 = scalar_lea.hbm %s0, %s143
          %s145 = smul.u32 %s140, 48
          %s146 = smul.addr %s145, 8
          %s147 = scalar_lea.vmem [#allocation2], %s146
          %s148 = scalar_lea.sflag [#allocation3], %s140
          // Predicated region
          $region25: #{tpu_custom_call.1} parent=23 // pred_check
            _
          $region26: #{tpu_custom_call.1} parent=23 // pred_check_branch
            %150 = sbr.rel target = $region28
          $region27: #{tpu_custom_call.1} parent=23 // pred_region
            %151 = sst [smem:[#allocation11]] [#allocation14]
            %152 = sst [smem:[#allocation12]] [#allocation13]
          $region28: #{tpu_custom_call.1} parent=23 // pred_fallthru
            _
          %154 = shalt.err (0)
          %s156 = sshll.u32 %s147, 4
          %s157 = int_to_ptr.vmem [resolvable:$true] %s156
          %159 = dma.hbm_to_vmem [thread:$0]  %s144, 6144, %s157, %s148
        $region24: #{tpu_custom_call.1} parent=11 // pred_fallthru
          _
        %s160 = smul.u32 %s119, 48
        %s161 = smul.addr %s160, 8
        %s162 = scalar_lea.vmem [#allocation2], %s161
        %s163 = scalar_lea.sflag [#allocation3], %s119
        %s164 = smul.u32 8, 6
        %s165 = smul.u32 %s164, 4
        %s166 = smul.u32 %s165, 2
        %s167 = sshll.u32 %s166, 4
        %168 = dma.done %s163, %s167
        %v169 = vld [vmem:[%s162] sm:$0xff]
        %v170 = vld [vmem:[%s162 + $0x8] sm:$0xff]
        %v171 = vld [vmem:[%s162 + $0x10] sm:$0xff]
        %v172 = vld [vmem:[%s162 + $0x18] sm:$0xff]
        %v173 = vld [vmem:[%s162 + $0x20] sm:$0xff]
        %v174 = vld [vmem:[%s162 + $0x28] sm:$0xff]
        %v175 = vld [vmem:[%s162 + $0x30] sm:$0xff]
        %v176 = vld [vmem:[%s162 + $0x38] sm:$0xff]
        %v177 = vld [vmem:[%s162 + $0x40] sm:$0xff]
        %v178 = vld [vmem:[%s162 + $0x48] sm:$0xff]
        %v179 = vld [vmem:[%s162 + $0x50] sm:$0xff]
        %v180 = vld [vmem:[%s162 + $0x58] sm:$0xff]
        %v181 = vld [vmem:[%s162 + $0x60] sm:$0xff]
        %v182 = vld [vmem:[%s162 + $0x68] sm:$0xff]
        %v183 = vld [vmem:[%s162 + $0x70] sm:$0xff]
        %v184 = vld [vmem:[%s162 + $0x78] sm:$0xff]
        %v185 = vld [vmem:[%s162 + $0x80] sm:$0xff]
        %v186 = vld [vmem:[%s162 + $0x88] sm:$0xff]
        %v187 = vld [vmem:[%s162 + $0x90] sm:$0xff]
        %v188 = vld [vmem:[%s162 + $0x98] sm:$0xff]
        %v189 = vld [vmem:[%s162 + $0xa0] sm:$0xff]
        %v190 = vld [vmem:[%s162 + $0xa8] sm:$0xff]
        %v191 = vld [vmem:[%s162 + $0xb0] sm:$0xff]
        %v192 = vld [vmem:[%s162 + $0xb8] sm:$0xff]
        %v193 = vld [vmem:[%s162 + $0xc0] sm:$0xff]
        %v194 = vld [vmem:[%s162 + $0xc8] sm:$0xff]
        %v195 = vld [vmem:[%s162 + $0xd0] sm:$0xff]
        %v196 = vld [vmem:[%s162 + $0xd8] sm:$0xff]
        %v197 = vld [vmem:[%s162 + $0xe0] sm:$0xff]
        %v198 = vld [vmem:[%s162 + $0xe8] sm:$0xff]
        %v199 = vld [vmem:[%s162 + $0xf0] sm:$0xff]
        %v200 = vld [vmem:[%s162 + $0xf8] sm:$0xff]
        %v201 = vld [vmem:[%s162 + $0x100] sm:$0xff]
        %v202 = vld [vmem:[%s162 + $0x108] sm:$0xff]
        %v203 = vld [vmem:[%s162 + $0x110] sm:$0xff]
        %v204 = vld [vmem:[%s162 + $0x118] sm:$0xff]
        %v205 = vld [vmem:[%s162 + $0x120] sm:$0xff]
        %v206 = vld [vmem:[%s162 + $0x128] sm:$0xff]
        %v207 = vld [vmem:[%s162 + $0x130] sm:$0xff]
        %v208 = vld [vmem:[%s162 + $0x138] sm:$0xff]
        %v209 = vld [vmem:[%s162 + $0x140] sm:$0xff]
        %v210 = vld [vmem:[%s162 + $0x148] sm:$0xff]
        %v211 = vld [vmem:[%s162 + $0x150] sm:$0xff]
        %v212 = vld [vmem:[%s162 + $0x158] sm:$0xff]
        %v213 = vld [vmem:[%s162 + $0x160] sm:$0xff]
        %v214 = vld [vmem:[%s162 + $0x168] sm:$0xff]
        %v215 = vld [vmem:[%s162 + $0x170] sm:$0xff]
        %v216 = vld [vmem:[%s162 + $0x178] sm:$0xff]
        %vm217 = vcmp.gt.f32.partialorder %v169, 0.8
        %vm218 = vcmp.gt.f32.partialorder %v170, 0.8
        %vm219 = vcmp.gt.f32.partialorder %v171, 0.8
        %vm220 = vcmp.gt.f32.partialorder %v172, 0.8
        %vm221 = vcmp.gt.f32.partialorder %v173, 0.8
        %vm222 = vcmp.gt.f32.partialorder %v174, 0.8
        %vm223 = vcmp.gt.f32.partialorder %v175, 0.8
        %vm224 = vcmp.gt.f32.partialorder %v176, 0.8
        %vm225 = vcmp.gt.f32.partialorder %v177, 0.8
        %vm226 = vcmp.gt.f32.partialorder %v178, 0.8
        %vm227 = vcmp.gt.f32.partialorder %v179, 0.8
        %vm228 = vcmp.gt.f32.partialorder %v180, 0.8
        %vm229 = vcmp.gt.f32.partialorder %v181, 0.8
        %vm230 = vcmp.gt.f32.partialorder %v182, 0.8
        %vm231 = vcmp.gt.f32.partialorder %v183, 0.8
        %vm232 = vcmp.gt.f32.partialorder %v184, 0.8
        %vm233 = vcmp.gt.f32.partialorder %v185, 0.8
        %vm234 = vcmp.gt.f32.partialorder %v186, 0.8
        %vm235 = vcmp.gt.f32.partialorder %v187, 0.8
        %vm236 = vcmp.gt.f32.partialorder %v188, 0.8
        %vm237 = vcmp.gt.f32.partialorder %v189, 0.8
        %vm238 = vcmp.gt.f32.partialorder %v190, 0.8
        %vm239 = vcmp.gt.f32.partialorder %v191, 0.8
        %vm240 = vcmp.gt.f32.partialorder %v192, 0.8
        %vm241 = vcmp.gt.f32.partialorder %v193, 0.8
        %vm242 = vcmp.gt.f32.partialorder %v194, 0.8
        %vm243 = vcmp.gt.f32.partialorder %v195, 0.8
        %vm244 = vcmp.gt.f32.partialorder %v196, 0.8
        %vm245 = vcmp.gt.f32.partialorder %v197, 0.8
        %vm246 = vcmp.gt.f32.partialorder %v198, 0.8
        %vm247 = vcmp.gt.f32.partialorder %v199, 0.8
        %vm248 = vcmp.gt.f32.partialorder %v200, 0.8
        %vm249 = vcmp.gt.f32.partialorder %v201, 0.8
        %vm250 = vcmp.gt.f32.partialorder %v202, 0.8
        %vm251 = vcmp.gt.f32.partialorder %v203, 0.8
        %vm252 = vcmp.gt.f32.partialorder %v204, 0.8
        %vm253 = vcmp.gt.f32.partialorder %v205, 0.8
        %vm254 = vcmp.gt.f32.partialorder %v206, 0.8
        %vm255 = vcmp.gt.f32.partialorder %v207, 0.8
        %vm256 = vcmp.gt.f32.partialorder %v208, 0.8
        %vm257 = vcmp.gt.f32.partialorder %v209, 0.8
        %vm258 = vcmp.gt.f32.partialorder %v210, 0.8
        %vm259 = vcmp.gt.f32.partialorder %v211, 0.8
        %vm260 = vcmp.gt.f32.partialorder %v212, 0.8
        %vm261 = vcmp.gt.f32.partialorder %v213, 0.8
        %vm262 = vcmp.gt.f32.partialorder %v214, 0.8
        %vm263 = vcmp.gt.f32.partialorder %v215, 0.8
        %vm264 = vcmp.gt.f32.partialorder %v216, 0.8
        %v265 = vsel %vm217, %v169, 0.0
        %v266 = vsel %vm218, %v170, 0.0
        %v267 = vsel %vm219, %v171, 0.0
        %v268 = vsel %vm220, %v172, 0.0
        %v269 = vsel %vm221, %v173, 0.0
        %v270 = vsel %vm222, %v174, 0.0
        %v271 = vsel %vm223, %v175, 0.0
        %v272 = vsel %vm224, %v176, 0.0
        %v273 = vsel %vm225, %v177, 0.0
        %v274 = vsel %vm226, %v178, 0.0
        %v275 = vsel %vm227, %v179, 0.0
        %v276 = vsel %vm228, %v180, 0.0
        %v277 = vsel %vm229, %v181, 0.0
        %v278 = vsel %vm230, %v182, 0.0
        %v279 = vsel %vm231, %v183, 0.0
        %v280 = vsel %vm232, %v184, 0.0
        %v281 = vsel %vm233, %v185, 0.0
        %v282 = vsel %vm234, %v186, 0.0
        %v283 = vsel %vm235, %v187, 0.0
        %v284 = vsel %vm236, %v188, 0.0
        %v285 = vsel %vm237, %v189, 0.0
        %v286 = vsel %vm238, %v190, 0.0
        %v287 = vsel %vm239, %v191, 0.0
        %v288 = vsel %vm240, %v192, 0.0
        %v289 = vsel %vm241, %v193, 0.0
        %v290 = vsel %vm242, %v194, 0.0
        %v291 = vsel %vm243, %v195, 0.0
        %v292 = vsel %vm244, %v196, 0.0
        %v293 = vsel %vm245, %v197, 0.0
        %v294 = vsel %vm246, %v198, 0.0
        %v295 = vsel %vm247, %v199, 0.0
        %v296 = vsel %vm248, %v200, 0.0
        %v297 = vsel %vm249, %v201, 0.0
        %v298 = vsel %vm250, %v202, 0.0
        %v299 = vsel %vm251, %v203, 0.0
        %v300 = vsel %vm252, %v204, 0.0
        %v301 = vsel %vm253, %v205, 0.0
        %v302 = vsel %vm254, %v206, 0.0
        %v303 = vsel %vm255, %v207, 0.0
        %v304 = vsel %vm256, %v208, 0.0
        %v305 = vsel %vm257, %v209, 0.0
        %v306 = vsel %vm258, %v210, 0.0
        %v307 = vsel %vm259, %v211, 0.0
        %v308 = vsel %vm260, %v212, 0.0
        %v309 = vsel %vm261, %v213, 0.0
        %v310 = vsel %vm262, %v214, 0.0
        %v311 = vsel %vm263, %v215, 0.0
        %v312 = vsel %vm264, %v216, 0.0
        %v313 = vadd.f32 %v169, %v177
        %v314 = vadd.f32 %v170, %v178
        %v315 = vadd.f32 %v171, %v179
        %v316 = vadd.f32 %v172, %v180
        %v317 = vadd.f32 %v173, %v181
        %v318 = vadd.f32 %v174, %v182
        %v319 = vadd.f32 %v175, %v183
        %v320 = vadd.f32 %v176, %v184
        %v321 = vadd.f32 %v177, %v185
        %v322 = vadd.f32 %v178, %v186
        %v323 = vadd.f32 %v179, %v187
        %v324 = vadd.f32 %v180, %v188
        %v325 = vadd.f32 %v181, %v189
        %v326 = vadd.f32 %v182, %v190
        %v327 = vadd.f32 %v183, %v191
        %v328 = vadd.f32 %v184, %v192
        %v329 = vadd.f32 %v185, %v193
        %v330 = vadd.f32 %v186, %v194
        %v331 = vadd.f32 %v187, %v195
        %v332 = vadd.f32 %v188, %v196
        %v333 = vadd.f32 %v189, %v197
        %v334 = vadd.f32 %v190, %v198
        %v335 = vadd.f32 %v191, %v199
        %v336 = vadd.f32 %v192, %v200
        %v337 = vadd.f32 %v193, %v201
        %v338 = vadd.f32 %v194, %v202
        %v339 = vadd.f32 %v195, %v203
        %v340 = vadd.f32 %v196, %v204
        %v341 = vadd.f32 %v197, %v205
        %v342 = vadd.f32 %v198, %v206
        %v343 = vadd.f32 %v199, %v207
        %v344 = vadd.f32 %v200, %v208
        %v345 = vmax.f32 %v265, %v273
        %v346 = vmax.f32 %v266, %v274
        %v347 = vmax.f32 %v267, %v275
        %v348 = vmax.f32 %v268, %v276
        %v349 = vmax.f32 %v269, %v277
        %v350 = vmax.f32 %v270, %v278
        %v351 = vmax.f32 %v271, %v279
        %v352 = vmax.f32 %v272, %v280
        %v353 = vmax.f32 %v273, %v281
        %v354 = vmax.f32 %v274, %v282
        %v355 = vmax.f32 %v275, %v283
        %v356 = vmax.f32 %v276, %v284
        %v357 = vmax.f32 %v277, %v285
        %v358 = vmax.f32 %v278, %v286
        %v359 = vmax.f32 %v279, %v287
        %v360 = vmax.f32 %v280, %v288
        %v361 = vmax.f32 %v281, %v289
        %v362 = vmax.f32 %v282, %v290
        %v363 = vmax.f32 %v283, %v291
        %v364 = vmax.f32 %v284, %v292
        %v365 = vmax.f32 %v285, %v293
        %v366 = vmax.f32 %v286, %v294
        %v367 = vmax.f32 %v287, %v295
        %v368 = vmax.f32 %v288, %v296
        %v369 = vmax.f32 %v289, %v297
        %v370 = vmax.f32 %v290, %v298
        %v371 = vmax.f32 %v291, %v299
        %v372 = vmax.f32 %v292, %v300
        %v373 = vmax.f32 %v293, %v301
        %v374 = vmax.f32 %v294, %v302
        %v375 = vmax.f32 %v295, %v303
        %v376 = vmax.f32 %v296, %v304
        %v377 = vadd.f32 %v313, %v185
        %v378 = vadd.f32 %v314, %v186
        %v379 = vadd.f32 %v315, %v187
        %v380 = vadd.f32 %v316, %v188
        %v381 = vadd.f32 %v317, %v189
        %v382 = vadd.f32 %v318, %v190
        %v383 = vadd.f32 %v319, %v191
        %v384 = vadd.f32 %v320, %v192
        %v385 = vadd.f32 %v321, %v193
        %v386 = vadd.f32 %v322, %v194
        %v387 = vadd.f32 %v323, %v195
        %v388 = vadd.f32 %v324, %v196
        %v389 = vadd.f32 %v325, %v197
        %v390 = vadd.f32 %v326, %v198
        %v391 = vadd.f32 %v327, %v199
        %v392 = vadd.f32 %v328, %v200
        %v393 = vadd.f32 %v329, %v201
        %v394 = vadd.f32 %v330, %v202
        %v395 = vadd.f32 %v331, %v203
        %v396 = vadd.f32 %v332, %v204
        %v397 = vadd.f32 %v333, %v205
        %v398 = vadd.f32 %v334, %v206
        %v399 = vadd.f32 %v335, %v207
        %v400 = vadd.f32 %v336, %v208
        %v401 = vadd.f32 %v337, %v209
        %v402 = vadd.f32 %v338, %v210
        %v403 = vadd.f32 %v339, %v211
        %v404 = vadd.f32 %v340, %v212
        %v405 = vadd.f32 %v341, %v213
        %v406 = vadd.f32 %v342, %v214
        %v407 = vadd.f32 %v343, %v215
        %v408 = vadd.f32 %v344, %v216
        %v409 = vmax.f32 %v345, %v281
        %v410 = vmax.f32 %v346, %v282
        %v411 = vmax.f32 %v347, %v283
        %v412 = vmax.f32 %v348, %v284
        %v413 = vmax.f32 %v349, %v285
        %v414 = vmax.f32 %v350, %v286
        %v415 = vmax.f32 %v351, %v287
        %v416 = vmax.f32 %v352, %v288
        %v417 = vmax.f32 %v353, %v289
        %v418 = vmax.f32 %v354, %v290
        %v419 = vmax.f32 %v355, %v291
        %v420 = vmax.f32 %v356, %v292
        %v421 = vmax.f32 %v357, %v293
        %v422 = vmax.f32 %v358, %v294
        %v423 = vmax.f32 %v359, %v295
        %v424 = vmax.f32 %v360, %v296
        %v425 = vmax.f32 %v361, %v297
        %v426 = vmax.f32 %v362, %v298
        %v427 = vmax.f32 %v363, %v299
        %v428 = vmax.f32 %v364, %v300
        %v429 = vmax.f32 %v365, %v301
        %v430 = vmax.f32 %v366, %v302
        %v431 = vmax.f32 %v367, %v303
        %v432 = vmax.f32 %v368, %v304
        %v433 = vmax.f32 %v369, %v305
        %v434 = vmax.f32 %v370, %v306
        %v435 = vmax.f32 %v371, %v307
        %v436 = vmax.f32 %v372, %v308
        %v437 = vmax.f32 %v373, %v309
        %v438 = vmax.f32 %v374, %v310
        %v439 = vmax.f32 %v375, %v311
        %v440 = vmax.f32 %v376, %v312
        %vm473 = vcmask 1046528
        %v474 = vrot.slane %v377, 1
        %v475 = vrot.slane %v379, 1
        %v476 = vsel %vm473, %v474, %v475
        %v477 = vrot.slane %v378, 1
        %v478 = vrot.slane %v380, 1
        %v479 = vsel %vm473, %v477, %v478
        %v480 = vrot.slane %v381, 1
        %v481 = vsel %vm473, %v475, %v480
        %v482 = vrot.slane %v382, 1
        %v483 = vsel %vm473, %v478, %v482
        %v484 = vrot.slane %v383, 1
        %v485 = vsel %vm473, %v480, %v484
        %v486 = vrot.slane %v384, 1
        %v487 = vsel %vm473, %v482, %v486
        %v488 = vrot.slane %v385, 1
        %v489 = vrot.slane %v387, 1
        %v490 = vsel %vm473, %v488, %v489
        %v491 = vrot.slane %v386, 1
        %v492 = vrot.slane %v388, 1
        %v493 = vsel %vm473, %v491, %v492
        %v494 = vrot.slane %v389, 1
        %v495 = vsel %vm473, %v489, %v494
        %v496 = vrot.slane %v390, 1
        %v497 = vsel %vm473, %v492, %v496
        %v498 = vrot.slane %v391, 1
        %v499 = vsel %vm473, %v494, %v498
        %v500 = vrot.slane %v392, 1
        %v501 = vsel %vm473, %v496, %v500
        %v502 = vrot.slane %v393, 1
        %v503 = vrot.slane %v395, 1
        %v504 = vsel %vm473, %v502, %v503
        %v505 = vrot.slane %v394, 1
        %v506 = vrot.slane %v396, 1
        %v507 = vsel %vm473, %v505, %v506
        %v508 = vrot.slane %v397, 1
        %v509 = vsel %vm473, %v503, %v508
        %v510 = vrot.slane %v398, 1
        %v511 = vsel %vm473, %v506, %v510
        %v512 = vrot.slane %v399, 1
        %v513 = vsel %vm473, %v508, %v512
        %v514 = vrot.slane %v400, 1
        %v515 = vsel %vm473, %v510, %v514
        %v516 = vrot.slane %v401, 1
        %v517 = vrot.slane %v403, 1
        %v518 = vsel %vm473, %v516, %v517
        %v519 = vrot.slane %v402, 1
        %v520 = vrot.slane %v404, 1
        %v521 = vsel %vm473, %v519, %v520
        %v522 = vrot.slane %v405, 1
        %v523 = vsel %vm473, %v517, %v522
        %v524 = vrot.slane %v406, 1
        %v525 = vsel %vm473, %v520, %v524
        %v526 = vrot.slane %v407, 1
        %v527 = vsel %vm473, %v522, %v526
        %v528 = vrot.slane %v408, 1
        %v529 = vsel %vm473, %v524, %v528
        %v554 = vadd.f32 %v377, %v476
        %v555 = vadd.f32 %v378, %v479
        %v556 = vadd.f32 %v379, %v481
        %v557 = vadd.f32 %v380, %v483
        %v558 = vadd.f32 %v381, %v485
        %v559 = vadd.f32 %v382, %v487
        %v560 = vadd.f32 %v385, %v490
        %v561 = vadd.f32 %v386, %v493
        %v562 = vadd.f32 %v387, %v495
        %v563 = vadd.f32 %v388, %v497
        %v564 = vadd.f32 %v389, %v499
        %v565 = vadd.f32 %v390, %v501
        %v566 = vadd.f32 %v393, %v504
        %v567 = vadd.f32 %v394, %v507
        %v568 = vadd.f32 %v395, %v509
        %v569 = vadd.f32 %v396, %v511
        %v570 = vadd.f32 %v397, %v513
        %v571 = vadd.f32 %v398, %v515
        %v572 = vadd.f32 %v401, %v518
        %v573 = vadd.f32 %v402, %v521
        %v574 = vadd.f32 %v403, %v523
        %v575 = vadd.f32 %v404, %v525
        %v576 = vadd.f32 %v405, %v527
        %v577 = vadd.f32 %v406, %v529
        %v610 = vrot.slane %v409, 1
        %v611 = vrot.slane %v411, 1
        %v612 = vsel %vm473, %v610, %v611
        %v613 = vrot.slane %v410, 1
        %v614 = vrot.slane %v412, 1
        %v615 = vsel %vm473, %v613, %v614
        %v616 = vrot.slane %v413, 1
        %v617 = vsel %vm473, %v611, %v616
        %v618 = vrot.slane %v414, 1
        %v619 = vsel %vm473, %v614, %v618
        %v620 = vrot.slane %v415, 1
        %v621 = vsel %vm473, %v616, %v620
        %v622 = vrot.slane %v416, 1
        %v623 = vsel %vm473, %v618, %v622
        %v624 = vrot.slane %v417, 1
        %v625 = vrot.slane %v419, 1
        %v626 = vsel %vm473, %v624, %v625
        %v627 = vrot.slane %v418, 1
        %v628 = vrot.slane %v420, 1
        %v629 = vsel %vm473, %v627, %v628
        %v630 = vrot.slane %v421, 1
        %v631 = vsel %vm473, %v625, %v630
        %v632 = vrot.slane %v422, 1
        %v633 = vsel %vm473, %v628, %v632
        %v634 = vrot.slane %v423, 1
        %v635 = vsel %vm473, %v630, %v634
        %v636 = vrot.slane %v424, 1
        %v637 = vsel %vm473, %v632, %v636
        %v638 = vrot.slane %v425, 1
        %v639 = vrot.slane %v427, 1
        %v640 = vsel %vm473, %v638, %v639
        %v641 = vrot.slane %v426, 1
        %v642 = vrot.slane %v428, 1
        %v643 = vsel %vm473, %v641, %v642
        %v644 = vrot.slane %v429, 1
        %v645 = vsel %vm473, %v639, %v644
        %v646 = vrot.slane %v430, 1
        %v647 = vsel %vm473, %v642, %v646
        %v648 = vrot.slane %v431, 1
        %v649 = vsel %vm473, %v644, %v648
        %v650 = vrot.slane %v432, 1
        %v651 = vsel %vm473, %v646, %v650
        %v652 = vrot.slane %v433, 1
        %v653 = vrot.slane %v435, 1
        %v654 = vsel %vm473, %v652, %v653
        %v655 = vrot.slane %v434, 1
        %v656 = vrot.slane %v436, 1
        %v657 = vsel %vm473, %v655, %v656
        %v658 = vrot.slane %v437, 1
        %v659 = vsel %vm473, %v653, %v658
        %v660 = vrot.slane %v438, 1
        %v661 = vsel %vm473, %v656, %v660
        %v662 = vrot.slane %v439, 1
        %v663 = vsel %vm473, %v658, %v662
        %v664 = vrot.slane %v440, 1
        %v665 = vsel %vm473, %v660, %v664
        %v690 = vmax.f32 %v409, %v612
        %v691 = vmax.f32 %v410, %v615
        %v692 = vmax.f32 %v411, %v617
        %v693 = vmax.f32 %v412, %v619
        %v694 = vmax.f32 %v413, %v621
        %v695 = vmax.f32 %v414, %v623
        %v696 = vmax.f32 %v417, %v626
        %v697 = vmax.f32 %v418, %v629
        %v698 = vmax.f32 %v419, %v631
        %v699 = vmax.f32 %v420, %v633
        %v700 = vmax.f32 %v421, %v635
        %v701 = vmax.f32 %v422, %v637
        %v702 = vmax.f32 %v425, %v640
        %v703 = vmax.f32 %v426, %v643
        %v704 = vmax.f32 %v427, %v645
        %v705 = vmax.f32 %v428, %v647
        %v706 = vmax.f32 %v429, %v649
        %v707 = vmax.f32 %v430, %v651
        %v708 = vmax.f32 %v433, %v654
        %v709 = vmax.f32 %v434, %v657
        %v710 = vmax.f32 %v435, %v659
        %v711 = vmax.f32 %v436, %v661
        %v712 = vmax.f32 %v437, %v663
        %v713 = vmax.f32 %v438, %v665
        %vm714 = vcmask 1045504
        %v715 = vrot.slane %v377, 2
        %v716 = vrot.slane %v379, 2
        %v717 = vsel %vm714, %v715, %v716
        %v718 = vrot.slane %v378, 2
        %v719 = vrot.slane %v380, 2
        %v720 = vsel %vm714, %v718, %v719
        %v721 = vrot.slane %v381, 2
        %v722 = vsel %vm714, %v716, %v721
        %v723 = vrot.slane %v382, 2
        %v724 = vsel %vm714, %v719, %v723
        %v725 = vrot.slane %v383, 2
        %v726 = vsel %vm714, %v721, %v725
        %v727 = vrot.slane %v384, 2
        %v728 = vsel %vm714, %v723, %v727
        %v729 = vrot.slane %v385, 2
        %v730 = vrot.slane %v387, 2
        %v731 = vsel %vm714, %v729, %v730
        %v732 = vrot.slane %v386, 2
        %v733 = vrot.slane %v388, 2
        %v734 = vsel %vm714, %v732, %v733
        %v735 = vrot.slane %v389, 2
        %v736 = vsel %vm714, %v730, %v735
        %v737 = vrot.slane %v390, 2
        %v738 = vsel %vm714, %v733, %v737
        %v739 = vrot.slane %v391, 2
        %v740 = vsel %vm714, %v735, %v739
        %v741 = vrot.slane %v392, 2
        %v742 = vsel %vm714, %v737, %v741
        %v743 = vrot.slane %v393, 2
        %v744 = vrot.slane %v395, 2
        %v745 = vsel %vm714, %v743, %v744
        %v746 = vrot.slane %v394, 2
        %v747 = vrot.slane %v396, 2
        %v748 = vsel %vm714, %v746, %v747
        %v749 = vrot.slane %v397, 2
        %v750 = vsel %vm714, %v744, %v749
        %v751 = vrot.slane %v398, 2
        %v752 = vsel %vm714, %v747, %v751
        %v753 = vrot.slane %v399, 2
        %v754 = vsel %vm714, %v749, %v753
        %v755 = vrot.slane %v400, 2
        %v756 = vsel %vm714, %v751, %v755
        %v757 = vrot.slane %v401, 2
        %v758 = vrot.slane %v403, 2
        %v759 = vsel %vm714, %v757, %v758
        %v760 = vrot.slane %v402, 2
        %v761 = vrot.slane %v404, 2
        %v762 = vsel %vm714, %v760, %v761
        %v763 = vrot.slane %v405, 2
        %v764 = vsel %vm714, %v758, %v763
        %v765 = vrot.slane %v406, 2
        %v766 = vsel %vm714, %v761, %v765
        %v767 = vrot.slane %v407, 2
        %v768 = vsel %vm714, %v763, %v767
        %v769 = vrot.slane %v408, 2
        %v770 = vsel %vm714, %v765, %v769
        %v795 = vadd.f32 %v554, %v717
        %v796 = vadd.f32 %v555, %v720
        %v797 = vadd.f32 %v556, %v722
        %v798 = vadd.f32 %v557, %v724
        %v799 = vadd.f32 %v558, %v726
        %v800 = vadd.f32 %v559, %v728
        %v801 = vadd.f32 %v560, %v731
        %v802 = vadd.f32 %v561, %v734
        %v803 = vadd.f32 %v562, %v736
        %v804 = vadd.f32 %v563, %v738
        %v805 = vadd.f32 %v564, %v740
        %v806 = vadd.f32 %v565, %v742
        %v807 = vadd.f32 %v566, %v745
        %v808 = vadd.f32 %v567, %v748
        %v809 = vadd.f32 %v568, %v750
        %v810 = vadd.f32 %v569, %v752
        %v811 = vadd.f32 %v570, %v754
        %v812 = vadd.f32 %v571, %v756
        %v813 = vadd.f32 %v572, %v759
        %v814 = vadd.f32 %v573, %v762
        %v815 = vadd.f32 %v574, %v764
        %v816 = vadd.f32 %v575, %v766
        %v817 = vadd.f32 %v576, %v768
        %v818 = vadd.f32 %v577, %v770
        %v819 = vrot.slane %v409, 2
        %v820 = vrot.slane %v411, 2
        %v821 = vsel %vm714, %v819, %v820
        %v822 = vrot.slane %v410, 2
        %v823 = vrot.slane %v412, 2
        %v824 = vsel %vm714, %v822, %v823
        %v825 = vrot.slane %v413, 2
        %v826 = vsel %vm714, %v820, %v825
        %v827 = vrot.slane %v414, 2
        %v828 = vsel %vm714, %v823, %v827
        %v829 = vrot.slane %v415, 2
        %v830 = vsel %vm714, %v825, %v829
        %v831 = vrot.slane %v416, 2
        %v832 = vsel %vm714, %v827, %v831
        %v833 = vrot.slane %v417, 2
        %v834 = vrot.slane %v419, 2
        %v835 = vsel %vm714, %v833, %v834
        %v836 = vrot.slane %v418, 2
        %v837 = vrot.slane %v420, 2
        %v838 = vsel %vm714, %v836, %v837
        %v839 = vrot.slane %v421, 2
        %v840 = vsel %vm714, %v834, %v839
        %v841 = vrot.slane %v422, 2
        %v842 = vsel %vm714, %v837, %v841
        %v843 = vrot.slane %v423, 2
        %v844 = vsel %vm714, %v839, %v843
        %v845 = vrot.slane %v424, 2
        %v846 = vsel %vm714, %v841, %v845
        %v847 = vrot.slane %v425, 2
        %v848 = vrot.slane %v427, 2
        %v849 = vsel %vm714, %v847, %v848
        %v850 = vrot.slane %v426, 2
        %v851 = vrot.slane %v428, 2
        %v852 = vsel %vm714, %v850, %v851
        %v853 = vrot.slane %v429, 2
        %v854 = vsel %vm714, %v848, %v853
        %v855 = vrot.slane %v430, 2
        %v856 = vsel %vm714, %v851, %v855
        %v857 = vrot.slane %v431, 2
        %v858 = vsel %vm714, %v853, %v857
        %v859 = vrot.slane %v432, 2
        %v860 = vsel %vm714, %v855, %v859
        %v861 = vrot.slane %v433, 2
        %v862 = vrot.slane %v435, 2
        %v863 = vsel %vm714, %v861, %v862
        %v864 = vrot.slane %v434, 2
        %v865 = vrot.slane %v436, 2
        %v866 = vsel %vm714, %v864, %v865
        %v867 = vrot.slane %v437, 2
        %v868 = vsel %vm714, %v862, %v867
        %v869 = vrot.slane %v438, 2
        %v870 = vsel %vm714, %v865, %v869
        %v871 = vrot.slane %v439, 2
        %v872 = vsel %vm714, %v867, %v871
        %v873 = vrot.slane %v440, 2
        %v874 = vsel %vm714, %v869, %v873
        %v899 = vmax.f32 %v690, %v821
        %v900 = vmax.f32 %v691, %v824
        %v901 = vmax.f32 %v692, %v826
        %v902 = vmax.f32 %v693, %v828
        %v903 = vmax.f32 %v694, %v830
        %v904 = vmax.f32 %v695, %v832
        %v905 = vmax.f32 %v696, %v835
        %v906 = vmax.f32 %v697, %v838
        %v907 = vmax.f32 %v698, %v840
        %v908 = vmax.f32 %v699, %v842
        %v909 = vmax.f32 %v700, %v844
        %v910 = vmax.f32 %v701, %v846
        %v911 = vmax.f32 %v702, %v849
        %v912 = vmax.f32 %v703, %v852
        %v913 = vmax.f32 %v704, %v854
        %v914 = vmax.f32 %v705, %v856
        %v915 = vmax.f32 %v706, %v858
        %v916 = vmax.f32 %v707, %v860
        %v917 = vmax.f32 %v708, %v863
        %v918 = vmax.f32 %v709, %v866
        %v919 = vmax.f32 %v710, %v868
        %v920 = vmax.f32 %v711, %v870
        %v921 = vmax.f32 %v712, %v872
        %v922 = vmax.f32 %v713, %v874
        %v923 = vmul.f32 %v795, -1.0
        %v924 = vmul.f32 %v797, -1.0
        %v925 = vmul.f32 %v799, -1.0
        %v926 = vmul.f32 %v801, -1.0
        %v927 = vmul.f32 %v803, -1.0
        %v928 = vmul.f32 %v805, -1.0
        %v929 = vmul.f32 %v807, -1.0
        %v930 = vmul.f32 %v809, -1.0
        %v931 = vmul.f32 %v811, -1.0
        %v932 = vmul.f32 %v813, -1.0
        %v933 = vmul.f32 %v815, -1.0
        %v934 = vmul.f32 %v817, -1.0
        %959 = vrot.lane.b32.xlu0 %v795, 127
        %v960 = vpop.permute.xlu0 %959
        %961 = vrot.lane.b32.xlu0 %v796, 127
        %v962 = vpop.permute.xlu0 %961
        %963 = vrot.lane.b32.xlu0 %v797, 127
        %v964 = vpop.permute.xlu0 %963
        %965 = vrot.lane.b32.xlu0 %v798, 127
        %v966 = vpop.permute.xlu0 %965
        %967 = vrot.lane.b32.xlu0 %v799, 127
        %v968 = vpop.permute.xlu0 %967
        %969 = vrot.lane.b32.xlu0 %v800, 127
        %v970 = vpop.permute.xlu0 %969
        %971 = vrot.lane.b32.xlu0 %v801, 127
        %v972 = vpop.permute.xlu0 %971
        %973 = vrot.lane.b32.xlu0 %v802, 127
        %v974 = vpop.permute.xlu0 %973
        %975 = vrot.lane.b32.xlu0 %v803, 127
        %v976 = vpop.permute.xlu0 %975
        %977 = vrot.lane.b32.xlu0 %v804, 127
        %v978 = vpop.permute.xlu0 %977
        %979 = vrot.lane.b32.xlu0 %v805, 127
        %v980 = vpop.permute.xlu0 %979
        %981 = vrot.lane.b32.xlu0 %v806, 127
        %v982 = vpop.permute.xlu0 %981
        %983 = vrot.lane.b32.xlu0 %v807, 127
        %v984 = vpop.permute.xlu0 %983
        %985 = vrot.lane.b32.xlu0 %v808, 127
        %v986 = vpop.permute.xlu0 %985
        %987 = vrot.lane.b32.xlu0 %v809, 127
        %v988 = vpop.permute.xlu0 %987
        %989 = vrot.lane.b32.xlu0 %v810, 127
        %v990 = vpop.permute.xlu0 %989
        %991 = vrot.lane.b32.xlu0 %v811, 127
        %v992 = vpop.permute.xlu0 %991
        %993 = vrot.lane.b32.xlu0 %v812, 127
        %v994 = vpop.permute.xlu0 %993
        %995 = vrot.lane.b32.xlu0 %v813, 127
        %v996 = vpop.permute.xlu0 %995
        %997 = vrot.lane.b32.xlu0 %v814, 127
        %v998 = vpop.permute.xlu0 %997
        %999 = vrot.lane.b32.xlu0 %v815, 127
        %v1000 = vpop.permute.xlu0 %999
        %1001 = vrot.lane.b32.xlu0 %v816, 127
        %v1002 = vpop.permute.xlu0 %1001
        %1003 = vrot.lane.b32.xlu0 %v817, 127
        %v1004 = vpop.permute.xlu0 %1003
        %1005 = vrot.lane.b32.xlu0 %v818, 127
        %v1006 = vpop.permute.xlu0 %1005
        %vm1007 = vcmask 1039360
        %v1008 = vsel %vm1007, %v960, %v962
        %v1009 = vsel %vm1007, %v964, %v966
        %v1010 = vsel %vm1007, %v968, %v970
        %v1011 = vsel %vm1007, %v972, %v974
        %v1012 = vsel %vm1007, %v976, %v978
        %v1013 = vsel %vm1007, %v980, %v982
        %v1014 = vsel %vm1007, %v984, %v986
        %v1015 = vsel %vm1007, %v988, %v990
        %v1016 = vsel %vm1007, %v992, %v994
        %v1017 = vsel %vm1007, %v996, %v998
        %v1018 = vsel %vm1007, %v1000, %v1002
        %v1019 = vsel %vm1007, %v1004, %v1006
        %v1032 = vadd.f32 %v795, %v1008
        %v1033 = vadd.f32 %v797, %v1009
        %v1034 = vadd.f32 %v799, %v1010
        %v1035 = vadd.f32 %v801, %v1011
        %v1036 = vadd.f32 %v803, %v1012
        %v1037 = vadd.f32 %v805, %v1013
        %v1038 = vadd.f32 %v807, %v1014
        %v1039 = vadd.f32 %v809, %v1015
        %v1040 = vadd.f32 %v811, %v1016
        %v1041 = vadd.f32 %v813, %v1017
        %v1042 = vadd.f32 %v815, %v1018
        %v1043 = vadd.f32 %v817, %v1019
        %1068 = vrot.lane.b32.xlu0 %v899, 127
        %v1069 = vpop.permute.xlu0 %1068
        %1070 = vrot.lane.b32.xlu0 %v900, 127
        %v1071 = vpop.permute.xlu0 %1070
        %1072 = vrot.lane.b32.xlu0 %v901, 127
        %v1073 = vpop.permute.xlu0 %1072
        %1074 = vrot.lane.b32.xlu0 %v902, 127
        %v1075 = vpop.permute.xlu0 %1074
        %1076 = vrot.lane.b32.xlu0 %v903, 127
        %v1077 = vpop.permute.xlu0 %1076
        %1078 = vrot.lane.b32.xlu0 %v904, 127
        %v1079 = vpop.permute.xlu0 %1078
        %1080 = vrot.lane.b32.xlu0 %v905, 127
        %v1081 = vpop.permute.xlu0 %1080
        %1082 = vrot.lane.b32.xlu0 %v906, 127
        %v1083 = vpop.permute.xlu0 %1082
        %1084 = vrot.lane.b32.xlu0 %v907, 127
        %v1085 = vpop.permute.xlu0 %1084
        %1086 = vrot.lane.b32.xlu0 %v908, 127
        %v1087 = vpop.permute.xlu0 %1086
        %1088 = vrot.lane.b32.xlu0 %v909, 127
        %v1089 = vpop.permute.xlu0 %1088
        %1090 = vrot.lane.b32.xlu0 %v910, 127
        %v1091 = vpop.permute.xlu0 %1090
        %1092 = vrot.lane.b32.xlu0 %v911, 127
        %v1093 = vpop.permute.xlu0 %1092
        %1094 = vrot.lane.b32.xlu0 %v912, 127
        %v1095 = vpop.permute.xlu0 %1094
        %1096 = vrot.lane.b32.xlu0 %v913, 127
        %v1097 = vpop.permute.xlu0 %1096
        %1098 = vrot.lane.b32.xlu0 %v914, 127
        %v1099 = vpop.permute.xlu0 %1098
        %1100 = vrot.lane.b32.xlu0 %v915, 127
        %v1101 = vpop.permute.xlu0 %1100
        %1102 = vrot.lane.b32.xlu0 %v916, 127
        %v1103 = vpop.permute.xlu0 %1102
        %1104 = vrot.lane.b32.xlu0 %v917, 127
        %v1105 = vpop.permute.xlu0 %1104
        %1106 = vrot.lane.b32.xlu0 %v918, 127
        %v1107 = vpop.permute.xlu0 %1106
        %1108 = vrot.lane.b32.xlu0 %v919, 127
        %v1109 = vpop.permute.xlu0 %1108
        %1110 = vrot.lane.b32.xlu0 %v920, 127
        %v1111 = vpop.permute.xlu0 %1110
        %1112 = vrot.lane.b32.xlu0 %v921, 127
        %v1113 = vpop.permute.xlu0 %1112
        %1114 = vrot.lane.b32.xlu0 %v922, 127
        %v1115 = vpop.permute.xlu0 %1114
        %v1116 = vsel %vm1007, %v1069, %v1071
        %v1117 = vsel %vm1007, %v1073, %v1075
        %v1118 = vsel %vm1007, %v1077, %v1079
        %v1119 = vsel %vm1007, %v1081, %v1083
        %v1120 = vsel %vm1007, %v1085, %v1087
        %v1121 = vsel %vm1007, %v1089, %v1091
        %v1122 = vsel %vm1007, %v1093, %v1095
        %v1123 = vsel %vm1007, %v1097, %v1099
        %v1124 = vsel %vm1007, %v1101, %v1103
        %v1125 = vsel %vm1007, %v1105, %v1107
        %v1126 = vsel %vm1007, %v1109, %v1111
        %v1127 = vsel %vm1007, %v1113, %v1115
        %v1140 = vmax.f32 %v899, %v1116
        %v1141 = vmax.f32 %v901, %v1117
        %v1142 = vmax.f32 %v903, %v1118
        %v1143 = vmax.f32 %v905, %v1119
        %v1144 = vmax.f32 %v907, %v1120
        %v1145 = vmax.f32 %v909, %v1121
        %v1146 = vmax.f32 %v911, %v1122
        %v1147 = vmax.f32 %v913, %v1123
        %v1148 = vmax.f32 %v915, %v1124
        %v1149 = vmax.f32 %v917, %v1125
        %v1150 = vmax.f32 %v919, %v1126
        %v1151 = vmax.f32 %v921, %v1127
        %1152 = vrot.lane.b32.xlu0 %v795, 126
        %v1153 = vpop.permute.xlu0 %1152
        %1154 = vrot.lane.b32.xlu0 %v796, 126
        %v1155 = vpop.permute.xlu0 %1154
        %1156 = vrot.lane.b32.xlu0 %v797, 126
        %v1157 = vpop.permute.xlu0 %1156
        %1158 = vrot.lane.b32.xlu0 %v798, 126
        %v1159 = vpop.permute.xlu0 %1158
        %1160 = vrot.lane.b32.xlu0 %v799, 126
        %v1161 = vpop.permute.xlu0 %1160
        %1162 = vrot.lane.b32.xlu0 %v800, 126
        %v1163 = vpop.permute.xlu0 %1162
        %1164 = vrot.lane.b32.xlu0 %v801, 126
        %v1165 = vpop.permute.xlu0 %1164
        %1166 = vrot.lane.b32.xlu0 %v802, 126
        %v1167 = vpop.permute.xlu0 %1166
        %1168 = vrot.lane.b32.xlu0 %v803, 126
        %v1169 = vpop.permute.xlu0 %1168
        %1170 = vrot.lane.b32.xlu0 %v804, 126
        %v1171 = vpop.permute.xlu0 %1170
        %1172 = vrot.lane.b32.xlu0 %v805, 126
        %v1173 = vpop.permute.xlu0 %1172
        %1174 = vrot.lane.b32.xlu0 %v806, 126
        %v1175 = vpop.permute.xlu0 %1174
        %1176 = vrot.lane.b32.xlu0 %v807, 126
        %v1177 = vpop.permute.xlu0 %1176
        %1178 = vrot.lane.b32.xlu0 %v808, 126
        %v1179 = vpop.permute.xlu0 %1178
        %1180 = vrot.lane.b32.xlu0 %v809, 126
        %v1181 = vpop.permute.xlu0 %1180
        %1182 = vrot.lane.b32.xlu0 %v810, 126
        %v1183 = vpop.permute.xlu0 %1182
        %1184 = vrot.lane.b32.xlu0 %v811, 126
        %v1185 = vpop.permute.xlu0 %1184
        %1186 = vrot.lane.b32.xlu0 %v812, 126
        %v1187 = vpop.permute.xlu0 %1186
        %1188 = vrot.lane.b32.xlu0 %v813, 126
        %v1189 = vpop.permute.xlu0 %1188
        %1190 = vrot.lane.b32.xlu0 %v814, 126
        %v1191 = vpop.permute.xlu0 %1190
        %1192 = vrot.lane.b32.xlu0 %v815, 126
        %v1193 = vpop.permute.xlu0 %1192
        %1194 = vrot.lane.b32.xlu0 %v816, 126
        %v1195 = vpop.permute.xlu0 %1194
        %1196 = vrot.lane.b32.xlu0 %v817, 126
        %v1197 = vpop.permute.xlu0 %1196
        %1198 = vrot.lane.b32.xlu0 %v818, 126
        %v1199 = vpop.permute.xlu0 %1198
        %vm1200 = vcmask 1031168
        %v1201 = vsel %vm1200, %v1153, %v1155
        %v1202 = vsel %vm1200, %v1157, %v1159
        %v1203 = vsel %vm1200, %v1161, %v1163
        %v1204 = vsel %vm1200, %v1165, %v1167
        %v1205 = vsel %vm1200, %v1169, %v1171
        %v1206 = vsel %vm1200, %v1173, %v1175
        %v1207 = vsel %vm1200, %v1177, %v1179
        %v1208 = vsel %vm1200, %v1181, %v1183
        %v1209 = vsel %vm1200, %v1185, %v1187
        %v1210 = vsel %vm1200, %v1189, %v1191
        %v1211 = vsel %vm1200, %v1193, %v1195
        %v1212 = vsel %vm1200, %v1197, %v1199
        %v1225 = vadd.f32 %v1032, %v1201
        %v1226 = vadd.f32 %v1033, %v1202
        %v1227 = vadd.f32 %v1034, %v1203
        %v1228 = vadd.f32 %v1035, %v1204
        %v1229 = vadd.f32 %v1036, %v1205
        %v1230 = vadd.f32 %v1037, %v1206
        %v1231 = vadd.f32 %v1038, %v1207
        %v1232 = vadd.f32 %v1039, %v1208
        %v1233 = vadd.f32 %v1040, %v1209
        %v1234 = vadd.f32 %v1041, %v1210
        %v1235 = vadd.f32 %v1042, %v1211
        %v1236 = vadd.f32 %v1043, %v1212
        %1237 = vrot.lane.b32.xlu0 %v899, 126
        %v1238 = vpop.permute.xlu0 %1237
        %1239 = vrot.lane.b32.xlu0 %v900, 126
        %v1240 = vpop.permute.xlu0 %1239
        %1241 = vrot.lane.b32.xlu0 %v901, 126
        %v1242 = vpop.permute.xlu0 %1241
        %1243 = vrot.lane.b32.xlu0 %v902, 126
        %v1244 = vpop.permute.xlu0 %1243
        %1245 = vrot.lane.b32.xlu0 %v903, 126
        %v1246 = vpop.permute.xlu0 %1245
        %1247 = vrot.lane.b32.xlu0 %v904, 126
        %v1248 = vpop.permute.xlu0 %1247
        %1249 = vrot.lane.b32.xlu0 %v905, 126
        %v1250 = vpop.permute.xlu0 %1249
        %1251 = vrot.lane.b32.xlu0 %v906, 126
        %v1252 = vpop.permute.xlu0 %1251
        %1253 = vrot.lane.b32.xlu0 %v907, 126
        %v1254 = vpop.permute.xlu0 %1253
        %1255 = vrot.lane.b32.xlu0 %v908, 126
        %v1256 = vpop.permute.xlu0 %1255
        %1257 = vrot.lane.b32.xlu0 %v909, 126
        %v1258 = vpop.permute.xlu0 %1257
        %1259 = vrot.lane.b32.xlu0 %v910, 126
        %v1260 = vpop.permute.xlu0 %1259
        %1261 = vrot.lane.b32.xlu0 %v911, 126
        %v1262 = vpop.permute.xlu0 %1261
        %1263 = vrot.lane.b32.xlu0 %v912, 126
        %v1264 = vpop.permute.xlu0 %1263
        %1265 = vrot.lane.b32.xlu0 %v913, 126
        %v1266 = vpop.permute.xlu0 %1265
        %1267 = vrot.lane.b32.xlu0 %v914, 126
        %v1268 = vpop.permute.xlu0 %1267
        %1269 = vrot.lane.b32.xlu0 %v915, 126
        %v1270 = vpop.permute.xlu0 %1269
        %1271 = vrot.lane.b32.xlu0 %v916, 126
        %v1272 = vpop.permute.xlu0 %1271
        %1273 = vrot.lane.b32.xlu0 %v917, 126
        %v1274 = vpop.permute.xlu0 %1273
        %1275 = vrot.lane.b32.xlu0 %v918, 126
        %v1276 = vpop.permute.xlu0 %1275
        %1277 = vrot.lane.b32.xlu0 %v919, 126
        %v1278 = vpop.permute.xlu0 %1277
        %1279 = vrot.lane.b32.xlu0 %v920, 126
        %v1280 = vpop.permute.xlu0 %1279
        %1281 = vrot.lane.b32.xlu0 %v921, 126
        %v1282 = vpop.permute.xlu0 %1281
        %1283 = vrot.lane.b32.xlu0 %v922, 126
        %v1284 = vpop.permute.xlu0 %1283
        %v1285 = vsel %vm1200, %v1238, %v1240
        %v1286 = vsel %vm1200, %v1242, %v1244
        %v1287 = vsel %vm1200, %v1246, %v1248
        %v1288 = vsel %vm1200, %v1250, %v1252
        %v1289 = vsel %vm1200, %v1254, %v1256
        %v1290 = vsel %vm1200, %v1258, %v1260
        %v1291 = vsel %vm1200, %v1262, %v1264
        %v1292 = vsel %vm1200, %v1266, %v1268
        %v1293 = vsel %vm1200, %v1270, %v1272
        %v1294 = vsel %vm1200, %v1274, %v1276
        %v1295 = vsel %vm1200, %v1278, %v1280
        %v1296 = vsel %vm1200, %v1282, %v1284
        %v1309 = vmax.f32 %v1140, %v1285
        %v1310 = vmax.f32 %v1141, %v1286
        %v1311 = vmax.f32 %v1142, %v1287
        %v1312 = vmax.f32 %v1143, %v1288
        %v1313 = vmax.f32 %v1144, %v1289
        %v1314 = vmax.f32 %v1145, %v1290
        %v1315 = vmax.f32 %v1146, %v1291
        %v1316 = vmax.f32 %v1147, %v1292
        %v1317 = vmax.f32 %v1148, %v1293
        %v1318 = vmax.f32 %v1149, %v1294
        %v1319 = vmax.f32 %v1150, %v1295
        %v1320 = vmax.f32 %v1151, %v1296
        %v1321 = vadd.f32 %v923, %v1201
        %v1322 = vadd.f32 %v924, %v1202
        %v1323 = vadd.f32 %v925, %v1203
        %v1324 = vadd.f32 %v926, %v1204
        %v1325 = vadd.f32 %v927, %v1205
        %v1326 = vadd.f32 %v928, %v1206
        %v1327 = vadd.f32 %v929, %v1207
        %v1328 = vadd.f32 %v930, %v1208
        %v1329 = vadd.f32 %v931, %v1209
        %v1330 = vadd.f32 %v932, %v1210
        %v1331 = vadd.f32 %v933, %v1211
        %v1332 = vadd.f32 %v934, %v1212
        %vm1333 = vcmp.gt.f32.partialorder %v1309, 0.0
        %vm1334 = vcmp.gt.f32.partialorder %v1310, 0.0
        %vm1335 = vcmp.gt.f32.partialorder %v1311, 0.0
        %vm1336 = vcmp.gt.f32.partialorder %v1312, 0.0
        %vm1337 = vcmp.gt.f32.partialorder %v1313, 0.0
        %vm1338 = vcmp.gt.f32.partialorder %v1314, 0.0
        %vm1339 = vcmp.gt.f32.partialorder %v1315, 0.0
        %vm1340 = vcmp.gt.f32.partialorder %v1316, 0.0
        %vm1341 = vcmp.gt.f32.partialorder %v1317, 0.0
        %vm1342 = vcmp.gt.f32.partialorder %v1318, 0.0
        %vm1343 = vcmp.gt.f32.partialorder %v1319, 0.0
        %vm1344 = vcmp.gt.f32.partialorder %v1320, 0.0
        %v1377 = vrot.slane %v273, 1
        %v1378 = vrot.slane %v275, 1
        %v1379 = vsel %vm473, %v1377, %v1378
        %v1380 = vrot.slane %v274, 1
        %v1381 = vrot.slane %v276, 1
        %v1382 = vsel %vm473, %v1380, %v1381
        %v1383 = vrot.slane %v277, 1
        %v1384 = vsel %vm473, %v1378, %v1383
        %v1385 = vrot.slane %v278, 1
        %v1386 = vsel %vm473, %v1381, %v1385
        %v1387 = vrot.slane %v279, 1
        %v1388 = vsel %vm473, %v1383, %v1387
        %v1389 = vrot.slane %v280, 1
        %v1390 = vsel %vm473, %v1385, %v1389
        %v1391 = vrot.slane %v281, 1
        %v1392 = vrot.slane %v283, 1
        %v1393 = vsel %vm473, %v1391, %v1392
        %v1394 = vrot.slane %v282, 1
        %v1395 = vrot.slane %v284, 1
        %v1396 = vsel %vm473, %v1394, %v1395
        %v1397 = vrot.slane %v285, 1
        %v1398 = vsel %vm473, %v1392, %v1397
        %v1399 = vrot.slane %v286, 1
        %v1400 = vsel %vm473, %v1395, %v1399
        %v1401 = vrot.slane %v287, 1
        %v1402 = vsel %vm473, %v1397, %v1401
        %v1403 = vrot.slane %v288, 1
        %v1404 = vsel %vm473, %v1399, %v1403
        %v1405 = vrot.slane %v289, 1
        %v1406 = vrot.slane %v291, 1
        %v1407 = vsel %vm473, %v1405, %v1406
        %v1408 = vrot.slane %v290, 1
        %v1409 = vrot.slane %v292, 1
        %v1410 = vsel %vm473, %v1408, %v1409
        %v1411 = vrot.slane %v293, 1
        %v1412 = vsel %vm473, %v1406, %v1411
        %v1413 = vrot.slane %v294, 1
        %v1414 = vsel %vm473, %v1409, %v1413
        %v1415 = vrot.slane %v295, 1
        %v1416 = vsel %vm473, %v1411, %v1415
        %v1417 = vrot.slane %v296, 1
        %v1418 = vsel %vm473, %v1413, %v1417
        %v1419 = vrot.slane %v297, 1
        %v1420 = vrot.slane %v299, 1
        %v1421 = vsel %vm473, %v1419, %v1420
        %v1422 = vrot.slane %v298, 1
        %v1423 = vrot.slane %v300, 1
        %v1424 = vsel %vm473, %v1422, %v1423
        %v1425 = vrot.slane %v301, 1
        %v1426 = vsel %vm473, %v1420, %v1425
        %v1427 = vrot.slane %v302, 1
        %v1428 = vsel %vm473, %v1423, %v1427
        %v1429 = vrot.slane %v303, 1
        %v1430 = vsel %vm473, %v1425, %v1429
        %v1431 = vrot.slane %v304, 1
        %v1432 = vsel %vm473, %v1427, %v1431
        %1433 = vrot.lane.b32.xlu0 %v1379, 127
        %v1434 = vpop.permute.xlu0 %1433
        %1435 = vrot.lane.b32.xlu0 %v1382, 127
        %v1436 = vpop.permute.xlu0 %1435
        %1437 = vrot.lane.b32.xlu0 %v1384, 127
        %v1438 = vpop.permute.xlu0 %1437
        %1439 = vrot.lane.b32.xlu0 %v1386, 127
        %v1440 = vpop.permute.xlu0 %1439
        %1441 = vrot.lane.b32.xlu0 %v1388, 127
        %v1442 = vpop.permute.xlu0 %1441
        %1443 = vrot.lane.b32.xlu0 %v1390, 127
        %v1444 = vpop.permute.xlu0 %1443
        %1445 = vrot.lane.b32.xlu0 %v1393, 127
        %v1446 = vpop.permute.xlu0 %1445
        %1447 = vrot.lane.b32.xlu0 %v1396, 127
        %v1448 = vpop.permute.xlu0 %1447
        %1449 = vrot.lane.b32.xlu0 %v1398, 127
        %v1450 = vpop.permute.xlu0 %1449
        %1451 = vrot.lane.b32.xlu0 %v1400, 127
        %v1452 = vpop.permute.xlu0 %1451
        %1453 = vrot.lane.b32.xlu0 %v1402, 127
        %v1454 = vpop.permute.xlu0 %1453
        %1455 = vrot.lane.b32.xlu0 %v1404, 127
        %v1456 = vpop.permute.xlu0 %1455
        %1457 = vrot.lane.b32.xlu0 %v1407, 127
        %v1458 = vpop.permute.xlu0 %1457
        %1459 = vrot.lane.b32.xlu0 %v1410, 127
        %v1460 = vpop.permute.xlu0 %1459
        %1461 = vrot.lane.b32.xlu0 %v1412, 127
        %v1462 = vpop.permute.xlu0 %1461
        %1463 = vrot.lane.b32.xlu0 %v1414, 127
        %v1464 = vpop.permute.xlu0 %1463
        %1465 = vrot.lane.b32.xlu0 %v1416, 127
        %v1466 = vpop.permute.xlu0 %1465
        %1467 = vrot.lane.b32.xlu0 %v1418, 127
        %v1468 = vpop.permute.xlu0 %1467
        %1469 = vrot.lane.b32.xlu0 %v1421, 127
        %v1470 = vpop.permute.xlu0 %1469
        %1471 = vrot.lane.b32.xlu0 %v1424, 127
        %v1472 = vpop.permute.xlu0 %1471
        %1473 = vrot.lane.b32.xlu0 %v1426, 127
        %v1474 = vpop.permute.xlu0 %1473
        %1475 = vrot.lane.b32.xlu0 %v1428, 127
        %v1476 = vpop.permute.xlu0 %1475
        %1477 = vrot.lane.b32.xlu0 %v1430, 127
        %v1478 = vpop.permute.xlu0 %1477
        %1479 = vrot.lane.b32.xlu0 %v1432, 127
        %v1480 = vpop.permute.xlu0 %1479
        %v1481 = vsel %vm1007, %v1434, %v1436
        %v1482 = vsel %vm1007, %v1438, %v1440
        %v1483 = vsel %vm1007, %v1442, %v1444
        %v1484 = vsel %vm1007, %v1446, %v1448
        %v1485 = vsel %vm1007, %v1450, %v1452
        %v1486 = vsel %vm1007, %v1454, %v1456
        %v1487 = vsel %vm1007, %v1458, %v1460
        %v1488 = vsel %vm1007, %v1462, %v1464
        %v1489 = vsel %vm1007, %v1466, %v1468
        %v1490 = vsel %vm1007, %v1470, %v1472
        %v1491 = vsel %vm1007, %v1474, %v1476
        %v1492 = vsel %vm1007, %v1478, %v1480
        %vm1505 = vcmp.eq.f32.partialorder %v1309, %v1481
        %vm1506 = vcmp.eq.f32.partialorder %v1310, %v1482
        %vm1507 = vcmp.eq.f32.partialorder %v1311, %v1483
        %vm1508 = vcmp.eq.f32.partialorder %v1312, %v1484
        %vm1509 = vcmp.eq.f32.partialorder %v1313, %v1485
        %vm1510 = vcmp.eq.f32.partialorder %v1314, %v1486
        %vm1511 = vcmp.eq.f32.partialorder %v1315, %v1487
        %vm1512 = vcmp.eq.f32.partialorder %v1316, %v1488
        %vm1513 = vcmp.eq.f32.partialorder %v1317, %v1489
        %vm1514 = vcmp.eq.f32.partialorder %v1318, %v1490
        %vm1515 = vcmp.eq.f32.partialorder %v1319, %v1491
        %vm1516 = vcmp.eq.f32.partialorder %v1320, %v1492
        %vm1517 = vmand %vm1333, %vm1505
        %vm1518 = vmand %vm1334, %vm1506
        %vm1519 = vmand %vm1335, %vm1507
        %vm1520 = vmand %vm1336, %vm1508
        %vm1521 = vmand %vm1337, %vm1509
        %vm1522 = vmand %vm1338, %vm1510
        %vm1523 = vmand %vm1339, %vm1511
        %vm1524 = vmand %vm1340, %vm1512
        %vm1525 = vmand %vm1341, %vm1513
        %vm1526 = vmand %vm1342, %vm1514
        %vm1527 = vmand %vm1343, %vm1515
        %vm1528 = vmand %vm1344, %vm1516
        %v1529 = vsel %vm1517, %v1309, 0.0
        %v1530 = vsel %vm1518, %v1310, 0.0
        %v1531 = vsel %vm1519, %v1311, 0.0
        %v1532 = vsel %vm1520, %v1312, 0.0
        %v1533 = vsel %vm1521, %v1313, 0.0
        %v1534 = vsel %vm1522, %v1314, 0.0
        %v1535 = vsel %vm1523, %v1315, 0.0
        %v1536 = vsel %vm1524, %v1316, 0.0
        %v1537 = vsel %vm1525, %v1317, 0.0
        %v1538 = vsel %vm1526, %v1318, 0.0
        %v1539 = vsel %vm1527, %v1319, 0.0
        %v1540 = vsel %vm1528, %v1320, 0.0
        %1541 = vst [vmem:[%s90] sm:$0xff] %v1529
        %1542 = vst [vmem:[%s90 + $0x8] sm:$0xff] %v1530
        %1543 = vst [vmem:[%s90 + $0x10] sm:$0xff] %v1531
        %1544 = vst [vmem:[%s90 + $0x18] sm:$0xff] %v1532
        %1545 = vst [vmem:[%s90 + $0x20] sm:$0xff] %v1533
        %1546 = vst [vmem:[%s90 + $0x28] sm:$0xff] %v1534
        %1547 = vst [vmem:[%s90 + $0x30] sm:$0xff] %v1535
        %1548 = vst [vmem:[%s90 + $0x38] sm:$0xff] %v1536
        %1549 = vst [vmem:[%s90 + $0x40] sm:$0xff] %v1537
        %1550 = vst [vmem:[%s90 + $0x48] sm:$0xff] %v1538
        %1551 = vst [vmem:[%s90 + $0x50] sm:$0xff] %v1539
        %1552 = vst [vmem:[%s90 + $0x58] sm:$0xff] %v1540
        %1553 = vst [vmem:[%s97] sm:$0xff] %v1225
        %1554 = vst [vmem:[%s97 + $0x8] sm:$0xff] %v1226
        %1555 = vst [vmem:[%s97 + $0x10] sm:$0xff] %v1227
        %1556 = vst [vmem:[%s97 + $0x18] sm:$0xff] %v1228
        %1557 = vst [vmem:[%s97 + $0x20] sm:$0xff] %v1229
        %1558 = vst [vmem:[%s97 + $0x28] sm:$0xff] %v1230
        %1559 = vst [vmem:[%s97 + $0x30] sm:$0xff] %v1231
        %1560 = vst [vmem:[%s97 + $0x38] sm:$0xff] %v1232
        %1561 = vst [vmem:[%s97 + $0x40] sm:$0xff] %v1233
        %1562 = vst [vmem:[%s97 + $0x48] sm:$0xff] %v1234
        %1563 = vst [vmem:[%s97 + $0x50] sm:$0xff] %v1235
        %1564 = vst [vmem:[%s97 + $0x58] sm:$0xff] %v1236
        %1565 = vst [vmem:[%s104] sm:$0xff] %v1321
        %1566 = vst [vmem:[%s104 + $0x8] sm:$0xff] %v1322
        %1567 = vst [vmem:[%s104 + $0x10] sm:$0xff] %v1323
        %1568 = vst [vmem:[%s104 + $0x18] sm:$0xff] %v1324
        %1569 = vst [vmem:[%s104 + $0x20] sm:$0xff] %v1325
        %1570 = vst [vmem:[%s104 + $0x28] sm:$0xff] %v1326
        %1571 = vst [vmem:[%s104 + $0x30] sm:$0xff] %v1327
        %1572 = vst [vmem:[%s104 + $0x38] sm:$0xff] %v1328
        %1573 = vst [vmem:[%s104 + $0x40] sm:$0xff] %v1329
        %1574 = vst [vmem:[%s104 + $0x48] sm:$0xff] %v1330
        %1575 = vst [vmem:[%s104 + $0x50] sm:$0xff] %v1331
        %1576 = vst [vmem:[%s104 + $0x58] sm:$0xff] %v1332
        %s1577 = sand.u32 %s25, 1
        %s1578 = scalar_lea.sflag [#allocation5], %s1577
        %s1579 = sand.u32 %s25, 1
        %s1580 = smul.addr %s1579, 96
        %s1581 = scalar_lea.vmem [#allocation4], %s1580
        %s1582 = sand.u32 %s16, 1
        %s1583 = scalar_lea.sflag [#allocation7], %s1582
        %s1584 = sand.u32 %s44, 1
        %s1585 = smul.addr %s1584, 96
        %s1586 = scalar_lea.vmem [#allocation6], %s1585
        %s1587 = sand.u32 %s16, 1
        %s1588 = scalar_lea.sflag [#allocation7], %s1587
        %s1589 = sand.u32 %s63, 1
        %s1590 = smul.addr %s1589, 96
        %s1591 = scalar_lea.vmem [#allocation8], %s1590
        // Predicated region
        $region29: #{tpu_custom_call.1} parent=11 // pred_check
          %p1592 = pneg %p31
        $region30: #{tpu_custom_call.1} parent=11 // pred_check_branch
          %1594 = sbr.rel (%p1592) target = $region32
        $region31: #{tpu_custom_call.1} parent=11 // pred_region
          %s1595 = smul.u32 4, %s16
          %s1597 = ssub.s32 1536, 1536
          %1598 = vsyncadd %s1578, %s1597
          %s1599 = smul.addr %s1595, 3
          %s1600 = smul.addr %s1599, 128
          %s1601 = scalar_lea.hbm %s1, %s1600
          %s1602 = sshll.u32 %s1581, 4
          %s1603 = int_to_ptr.vmem [resolvable:$true] %s1602
          %1608 = dma.vmem_to_hbm [thread:$0]  %s1603, 1536, %s1601, %s1578, 128, 128, 8
        $region32: #{tpu_custom_call.1} parent=11 // pred_fallthru
          _
        // Predicated region
        $region33: #{tpu_custom_call.1} parent=11 // pred_check
          %p1609 = pneg %p50
        $region34: #{tpu_custom_call.1} parent=11 // pred_check_branch
          %1611 = sbr.rel (%p1609) target = $region36
        $region35: #{tpu_custom_call.1} parent=11 // pred_region
          %s1612 = smul.u32 4, %s16
          %s1614 = ssub.s32 1536, 1536
          %1615 = vsyncadd %s1583, %s1614
          %s1616 = smul.addr %s1612, 3
          %s1617 = smul.addr %s1616, 128
          %s1618 = scalar_lea.hbm %s2, %s1617
          %s1619 = sshll.u32 %s1586, 4
          %s1620 = int_to_ptr.vmem [resolvable:$true] %s1619
          %1625 = dma.vmem_to_hbm [thread:$0]  %s1620, 1536, %s1618, %s1583, 128, 128, 8
        $region36: #{tpu_custom_call.1} parent=11 // pred_fallthru
          _
        // Predicated region
        $region37: #{tpu_custom_call.1} parent=11 // pred_check
          %p1626 = pneg %p69
        $region38: #{tpu_custom_call.1} parent=11 // pred_check_branch
          %1628 = sbr.rel (%p1626) target = $region40
        $region39: #{tpu_custom_call.1} parent=11 // pred_region
          %s1629 = smul.u32 4, %s16
          %s1631 = ssub.s32 1536, 1536
          %1632 = vsyncadd %s1588, %s1631
          %s1633 = smul.addr %s1629, 3
          %s1634 = smul.addr %s1633, 128
          %s1635 = scalar_lea.hbm %s3, %s1634
          %s1636 = sshll.u32 %s1591, 4
          %s1637 = int_to_ptr.vmem [resolvable:$true] %s1636
          %1642 = dma.vmem_to_hbm [thread:$0]  %s1637, 1536, %s1635, %s1588, 128, 128, 8
        $region40: #{tpu_custom_call.1} parent=11 // pred_fallthru
          _
      $region12: #{tpu_custom_call.1} parent=5 // pred_fallthru
        _
      %p1643 = scmp.le.s32.totalorder 1, %s16
      // Predicated region
      $region41: #{tpu_custom_call.1} parent=5 // pred_check
        %p1644 = pneg %p1643
      $region42: #{tpu_custom_call.1} parent=5 // pred_check_branch
        %1646 = sbr.rel (%p1644) target = $region44
      $region43: #{tpu_custom_call.1} parent=5 // pred_region
        %s1647 = ssub.s32 %s16, 1
        // Predicated region
        $region45: #{tpu_custom_call.1} parent=43 // pred_check
          %p1648 = pneg %p37
        $region46: #{tpu_custom_call.1} parent=43 // pred_check_branch
          %1650 = sbr.rel (%p1648) target = $region48
        $region47: #{tpu_custom_call.1} parent=43 // pred_region
          %s1651 = sand.u32 %s28, 1
          %s1652 = scalar_lea.sflag [#allocation5], %s1651
          %s1653 = sand.u32 %s28, 1
          %s1654 = smul.addr %s1653, 96
          %s1655 = scalar_lea.vmem [#allocation4], %s1654
          %1656 = dma.done %s1652, 1536
        $region48: #{tpu_custom_call.1} parent=43 // pred_fallthru
          _
        // Predicated region
        $region49: #{tpu_custom_call.1} parent=43 // pred_check
          %p1657 = pneg %p56
        $region50: #{tpu_custom_call.1} parent=43 // pred_check_branch
          %1659 = sbr.rel (%p1657) target = $region52
        $region51: #{tpu_custom_call.1} parent=43 // pred_region
          %s1660 = sand.u32 %s21, 1
          %s1661 = scalar_lea.sflag [#allocation7], %s1660
          %s1662 = sand.u32 %s47, 1
          %s1663 = smul.addr %s1662, 96
          %s1664 = scalar_lea.vmem [#allocation6], %s1663
          %1665 = dma.done %s1661, 1536
        $region52: #{tpu_custom_call.1} parent=43 // pred_fallthru
          _
        // Predicated region
        $region53: #{tpu_custom_call.1} parent=43 // pred_check
          %p1666 = pneg %p75
        $region54: #{tpu_custom_call.1} parent=43 // pred_check_branch
          %1668 = sbr.rel (%p1666) target = $region56
        $region55: #{tpu_custom_call.1} parent=43 // pred_region
          %s1669 = sand.u32 %s21, 1
          %s1670 = scalar_lea.sflag [#allocation7], %s1669
          %s1671 = sand.u32 %s66, 1
          %s1672 = smul.addr %s1671, 96
          %s1673 = scalar_lea.vmem [#allocation8], %s1672
          %1674 = dma.done %s1670, 1536
        $region56: #{tpu_custom_call.1} parent=43 // pred_fallthru
          _
      $region44: #{tpu_custom_call.1} parent=5 // pred_fallthru
        _
    $region6: #{tpu_custom_call.1} parent=1 // loop_footer
      %s20 = sadd.s32 1, %s16
    $region7: #{tpu_custom_call.1} parent=1 // loop_footer_branch
      %15 = sbr.rel target = $region3
    $region8: #{tpu_custom_call.1} parent=1 // loop_exit
      _
    %1675 = vsyncpa [#allocation5], 1
    %s1676 = scalar_lea.sflag [#allocation5], 1
    %1677 = vsyncpa %s1676, 1
    %1678 = vsyncpa [#allocation7], 1
    %s1679 = scalar_lea.sflag [#allocation7], 1
    %1680 = vsyncpa %s1679, 1
  %1681 = vsyncmov [#allocation3]
  %s1682 = vpop.sfrf %1681
  %p1683 = scmp.eq.s32.totalorder %s1682, 0
  %p1684 = pneg %p1683
  %1686 = shalt.err (%p1684)
  %s1687 = scalar_lea.sflag [#allocation3], 1
  %1688 = vsyncmov %s1687
  %s1689 = vpop.sfrf %1688
  %p1690 = scmp.eq.s32.totalorder %s1689, 0
  %p1691 = pneg %p1690
  %1693 = shalt.err (%p1691)

</llo_original>
